<compile_context>
chip_gen: v6e
topology: v6e:2x2x1
jax: 0.10.0
libtpu: 0.0.40
codegen_flags: <defaults>
</compile_context>

<pallas_src>
import functools

import jax
import jax.numpy as jnp
import numpy as np
from jax.experimental import pallas as pl
from jax.experimental.pallas import tpu as pltpu

HIDDEN_DIM = 32
INPUT_DIM = 1
NUM_LAYERS = 2
OUTPUT_DIM = 1


def fused_lstm_kernel(x_ref, wih0_ref, whh0_ref, b0_ref,
                      wih1_ref, whh1_ref, b1_ref,
                      wfc_ref, bfc_ref,
                      out_ref,
                      gates_scr, h0seq_scr,
                      *, T, B, H):
    """Whole 2-layer LSTM + FC forward in a single kernel invocation (no grid)."""

    def gate_activations(pre):
        # Weights/bias were reordered to [i, f, o, g] and the g block scaled
        # by 2, so a single full-vreg sigmoid covers all four gates:
        #   tanh(z) = 2 * sigmoid(2z) - 1.
        s = jax.nn.sigmoid(pre)                       # (B, 4H) — one EUP pass
        i = s[:, 0 * H:1 * H]
        f = s[:, 1 * H:2 * H]
        o = s[:, 2 * H:3 * H]
        g = 2.0 * s[:, 3 * H:4 * H] - 1.0
        return i, f, o, g

    def cell_step(pre, h, c):
        i, f, o, g = gate_activations(pre)
        c_new = f * c + i * g
        h_new = o * jnp.tanh(c_new)
        return h_new, c_new

    zeros = jnp.zeros((B, H), jnp.float32)

    # ---- layer 0: input projection hoisted out of the recurrence -----------
    # x is (T*B, 1), W_ih0 is (1, 4H): broadcast multiply on the VPU.  Bias is
    # folded in here once for all timesteps.
    gates_scr[...] = x_ref[...] * wih0_ref[...] + b0_ref[...]

    def step0(t, carry):
        h, c = carry
        r = pl.multiple_of(t * B, B)
        pre = gates_scr[pl.ds(r, B), :] + jnp.dot(
            h, whh0_ref[...], preferred_element_type=jnp.float32)
        h_new, c_new = cell_step(pre, h, c)
        h0seq_scr[pl.ds(r, B), :] = h_new          # stays in VMEM for layer 1
        return h_new, c_new

    jax.lax.fori_loop(0, T, step0, (zeros, zeros), unroll=True)

    # ---- layer 1: one big input-projection matmul, then the recurrence -----
    gates_scr[...] = jnp.dot(h0seq_scr[...], wih1_ref[...],
                             preferred_element_type=jnp.float32) + b1_ref[...]

    def step1(t, carry):
        h, c = carry
        r = pl.multiple_of(t * B, B)
        pre = gates_scr[pl.ds(r, B), :] + jnp.dot(
            h, whh1_ref[...], preferred_element_type=jnp.float32)
        return cell_step(pre, h, c)

    h_last, _ = jax.lax.fori_loop(0, T, step1, (zeros, zeros), unroll=True)

    # ---- FC head: only the final (B, output_dim) leaves the kernel ---------
    out_ref[...] = jnp.dot(h_last, wfc_ref[...],
                           preferred_element_type=jnp.float32) + bfc_ref[...]


def lstm_forward(params, x_btd):
    """x_btd: (B, T, D_in) -> (B, OUTPUT_DIM). Matches PyTorch LSTM.forward."""
    B, T, D = x_btd.shape
    H = HIDDEN_DIM
    # Time-major, flattened to (T*B, D) so each timestep is a contiguous,
    # sublane-aligned (B, :) row block inside the kernel scratch buffers.
    x_flat = jnp.transpose(x_btd, (1, 0, 2)).reshape(T * B, D).astype(jnp.float32)

    kernel = functools.partial(fused_lstm_kernel, T=T, B=B, H=H)
    vmem = pl.BlockSpec(memory_space=pltpu.MemorySpace.VMEM)
    return pl.pallas_call(
        kernel,
        out_shape=jax.ShapeDtypeStruct((B, OUTPUT_DIM), jnp.float32),
        in_specs=[vmem] * 9,
        out_specs=vmem,
        scratch_shapes=[
            pltpu.VMEM((T * B, 4 * H), jnp.float32),   # hoisted gate pre-acts
            pltpu.VMEM((T * B, H), jnp.float32),       # layer-0 hidden sequence
        ],
    )(x_flat,
      params["wih0"], params["whh0"], params["b0"],
      params["wih1"], params["whh1"], params["b1"],
      params["fc_w_t"], params["fc_b"])


# ----------------------------- parameter prep --------------------------------

def init_raw_params(key, input_dim, hidden_dim, num_layers, output_dim):
    """Raw torch-layout weights (same shapes / init range as nn.LSTM, nn.Linear)."""
    k = 1.0 / np.sqrt(hidden_dim)
    keys = jax.random.split(key, num_layers * 4 + 2)
    ki = 0
    layers = []
    for l in range(num_layers):
        in_d = input_dim if l == 0 else hidden_dim
        w_ih = jax.random.uniform(keys[ki], (4 * hidden_dim, in_d),
                                  minval=-k, maxval=k, dtype=jnp.float32); ki += 1
        w_hh = jax.random.uniform(keys[ki], (4 * hidden_dim, hidden_dim),
                                  minval=-k, maxval=k, dtype=jnp.float32); ki += 1
        b_ih = jax.random.uniform(keys[ki], (4 * hidden_dim,),
                                  minval=-k, maxval=k, dtype=jnp.float32); ki += 1
        b_hh = jax.random.uniform(keys[ki], (4 * hidden_dim,),
                                  minval=-k, maxval=k, dtype=jnp.float32); ki += 1
        layers.append({"w_ih": w_ih, "w_hh": w_hh, "b_ih": b_ih, "b_hh": b_hh})
    w_fc = jax.random.uniform(keys[ki], (output_dim, hidden_dim),
                              minval=-k, maxval=k, dtype=jnp.float32); ki += 1
    b_fc = jax.random.uniform(keys[ki], (output_dim,),
                              minval=-k, maxval=k, dtype=jnp.float32)
    return {"layers": layers, "fc_w": w_fc, "fc_b": b_fc}


def _reorder_and_scale_gates(mat_4h_rows, H):
    """torch gate row blocks [i,f,g,o] -> [i,f,o,2*g] (g pre-scaled by 2)."""
    i, f, g, o = (mat_4h_rows[0:H], mat_4h_rows[H:2 * H],
                  mat_4h_rows[2 * H:3 * H], mat_4h_rows[3 * H:4 * H])
    return jnp.concatenate([i, f, o, 2.0 * g], axis=0)


def prep_kernel_params(raw, hidden_dim, output_dim):
    """Kernel layout: weights transposed to (in, 4H), gates [i,f,o,2g], fused bias."""
    H = hidden_dim
    out = {}
    for l, layer in enumerate(raw["layers"]):
        w_ih = _reorder_and_scale_gates(layer["w_ih"], H).T        # (in_d, 4H)
        w_hh = _reorder_and_scale_gates(layer["w_hh"], H).T        # (H, 4H)
        b = _reorder_and_scale_gates(
            (layer["b_ih"] + layer["b_hh"])[:, None], H).reshape(1, 4 * H)
        out[f"wih{l}"] = w_ih.astype(jnp.float32)
        out[f"whh{l}"] = w_hh.astype(jnp.float32)
        out[f"b{l}"] = b.astype(jnp.float32)
    out["fc_w_t"] = raw["fc_w"].T.astype(jnp.float32)              # (H, O)
    out["fc_b"] = raw["fc_b"].reshape(1, output_dim).astype(jnp.float32)
    return out


# ------------------------------ reference ------------------------------------

def lstm_forward_ref(raw, x_btd):
    """Pure-JAX reference using the standard torch [i,f,g,o] formulation."""
    x = jnp.transpose(x_btd, (1, 0, 2)).astype(jnp.float32)        # (T, B, D)
    B = x.shape[1]
    H = HIDDEN_DIM
    for layer in raw["layers"]:
        w_ih_t = layer["w_ih"].T
        w_hh_t = layer["w_hh"].T
        b = (layer["b_ih"] + layer["b_hh"])[None, :]

        def step(carry, x_t, w_ih_t=w_ih_t, w_hh_t=w_hh_t, b=b):
            h, c = carry
            gates = x_t @ w_ih_t + h @ w_hh_t + b
            i = jax.nn.sigmoid(gates[:, 0 * H:1 * H])
            f = jax.nn.sigmoid(gates[:, 1 * H:2 * H])
            g = jnp.tanh(gates[:, 2 * H:3 * H])
            o = jax.nn.sigmoid(gates[:, 3 * H:4 * H])
            c_new = f * c + i * g
            h_new = o * jnp.tanh(c_new)
            return (h_new, c_new), h_new

        init = (jnp.zeros((B, H), jnp.float32), jnp.zeros((B, H), jnp.float32))
        _, hs = jax.lax.scan(step, init, x)
        x = hs
    return x[-1] @ raw["fc_w"].T + raw["fc_b"][None, :]


if __name__ == "__main__":
    key = jax.random.PRNGKey(0)
    k_param, k_x = jax.random.split(key)

    batch, seq_len = 8, 8
    raw = init_raw_params(k_param, INPUT_DIM, HIDDEN_DIM, NUM_LAYERS, OUTPUT_DIM)
    kparams = prep_kernel_params(raw, HIDDEN_DIM, OUTPUT_DIM)
    x = jax.random.normal(k_x, (batch, seq_len, INPUT_DIM), dtype=jnp.float32)

    fwd = jax.jit(lstm_forward)
    out = jax.block_until_ready(fwd(kparams, x))

    ref = jax.block_until_ready(lstm_forward_ref(raw, x))
    assert out.shape == (batch, OUTPUT_DIM)
    # Tolerance accounts for the tanh(z) == 2*sigmoid(2z) - 1 rewrite used for
    # the g gate inside the kernel (different EUP approximation path).
    np.testing.assert_allclose(np.asarray(out), np.asarray(ref),
                               rtol=1e-4, atol=1e-4)
    print("KERNEL_OK")
</pallas_src>

<mosaic_0001>
module attributes {stable_mosaic.version = 11 : i64} {
  func.func @fused_lstm_kernel(%arg0: memref<64x1xf32, #tpu.memory_space<vmem>>, %arg1: memref<1x128xf32, #tpu.memory_space<vmem>>, %arg2: memref<32x128xf32, #tpu.memory_space<vmem>>, %arg3: memref<1x128xf32, #tpu.memory_space<vmem>>, %arg4: memref<32x128xf32, #tpu.memory_space<vmem>>, %arg5: memref<32x128xf32, #tpu.memory_space<vmem>>, %arg6: memref<1x128xf32, #tpu.memory_space<vmem>>, %arg7: memref<32x1xf32, #tpu.memory_space<vmem>>, %arg8: memref<1x1xf32, #tpu.memory_space<vmem>>, %arg9: memref<8x1xf32, #tpu.memory_space<vmem>>, %arg10: memref<64x128xf32, #tpu.memory_space<vmem>>, %arg11: memref<64x32xf32, #tpu.memory_space<vmem>>) attributes {dimension_semantics = [], scalar_prefetch = 0 : i64, scratch_operands = 2 : i64, tpu.core_type = #tpu.core_type<tc>} {
    %cst = arith.constant 0.000000e+00 : f32
    %0 = vector.broadcast %cst : f32 to vector<8x32xf32>
    %c0 = arith.constant 0 : index
    %c0_0 = arith.constant 0 : index
    %1 = vector.load %arg0[%c0, %c0_0] : memref<64x1xf32, #tpu.memory_space<vmem>>, vector<64x1xf32>
    %c0_1 = arith.constant 0 : index
    %c0_2 = arith.constant 0 : index
    %2 = vector.load %arg1[%c0_1, %c0_2] : memref<1x128xf32, #tpu.memory_space<vmem>>, vector<1x128xf32>
    %3 = vector.broadcast %1 : vector<64x1xf32> to vector<64x128xf32>
    %4 = vector.broadcast %2 : vector<1x128xf32> to vector<64x128xf32>
    %5 = arith.mulf %3, %4 : vector<64x128xf32>
    %c0_3 = arith.constant 0 : index
    %c0_4 = arith.constant 0 : index
    %6 = vector.load %arg3[%c0_3, %c0_4] : memref<1x128xf32, #tpu.memory_space<vmem>>, vector<1x128xf32>
    %7 = vector.broadcast %6 : vector<1x128xf32> to vector<64x128xf32>
    %8 = arith.addf %5, %7 : vector<64x128xf32>
    %c0_5 = arith.constant 0 : index
    %c0_6 = arith.constant 0 : index
    %9 = vector.load %arg10[%c0_5, %c0_6] : memref<64x128xf32, #tpu.memory_space<vmem>>, vector<64x128xf32>
    tpu.vector_store %arg10[%c0_5, %c0_6], %8 {strides = array<i32>} : memref<64x128xf32, #tpu.memory_space<vmem>>, vector<64x128xf32>,
    %c0_i32 = arith.constant 0 : i32
    %c8_i32 = arith.constant 8 : i32
    %10 = arith.muli %c0_i32, %c8_i32 : i32
    %11 = tpu.assume_multiple %10, 8 : i32
    %12 = arith.index_cast %11 : i32 to index
    %c0_7 = arith.constant 0 : index
    %13 = vector.load %arg10[%12, %c0_7] : memref<64x128xf32, #tpu.memory_space<vmem>>, vector<8x128xf32>
    %c0_8 = arith.constant 0 : index
    %c0_9 = arith.constant 0 : index
    %14 = vector.load %arg2[%c0_8, %c0_9] : memref<32x128xf32, #tpu.memory_space<vmem>>, vector<32x128xf32>
    %cst_10 = arith.constant dense<0.000000e+00> : vector<8x128xf32>
    %15 = tpu.matmul %0, %14, %cst_10 {dimension_numbers = #tpu.dot_dimension_numbers<[1], [0], [0], [1], [0, 0, 1, 1], [], []>} : vector<8x32xf32>, vector<32x128xf32>, vector<8x128xf32> -> vector<8x128xf32>
    %16 = arith.addf %13, %15 : vector<8x128xf32>
    %17 = arith.negf %16 : vector<8x128xf32>
    %18 = math.exp %17 : vector<8x128xf32>
    %cst_11 = arith.constant 1.000000e+00 : f32
    %19 = vector.broadcast %cst_11 : f32 to vector<8x128xf32>
    %20 = arith.addf %19, %18 : vector<8x128xf32>
    %21 = arith.divf %19, %20 : vector<8x128xf32>
    %22 = vector.extract_strided_slice %21 {offsets = [0, 0], sizes = [8, 32], strides = [1, 1]} : vector<8x128xf32> to vector<8x32xf32>
    %23 = vector.extract_strided_slice %21 {offsets = [0, 32], sizes = [8, 32], strides = [1, 1]} : vector<8x128xf32> to vector<8x32xf32>
    %24 = vector.extract_strided_slice %21 {offsets = [0, 64], sizes = [8, 32], strides = [1, 1]} : vector<8x128xf32> to vector<8x32xf32>
    %25 = vector.extract_strided_slice %21 {offsets = [0, 96], sizes = [8, 32], strides = [1, 1]} : vector<8x128xf32> to vector<8x32xf32>
    %cst_12 = arith.constant 2.000000e+00 : f32
    %26 = vector.broadcast %cst_12 : f32 to vector<8x32xf32>
    %27 = arith.mulf %26, %25 : vector<8x32xf32>
    %cst_13 = arith.constant 1.000000e+00 : f32
    %28 = vector.broadcast %cst_13 : f32 to vector<8x32xf32>
    %29 = arith.subf %27, %28 : vector<8x32xf32>
    %30 = arith.mulf %23, %0 : vector<8x32xf32>
    %31 = arith.mulf %22, %29 : vector<8x32xf32>
    %32 = arith.addf %30, %31 : vector<8x32xf32>
    %33 = math.tanh %32 : vector<8x32xf32>
    %34 = arith.mulf %24, %33 : vector<8x32xf32>
    %35 = arith.index_cast %11 : i32 to index
    %c0_14 = arith.constant 0 : index
    %36 = vector.load %arg11[%35, %c0_14] : memref<64x32xf32, #tpu.memory_space<vmem>>, vector<8x32xf32>
    tpu.vector_store %arg11[%35, %c0_14], %34 {strides = array<i32>} : memref<64x32xf32, #tpu.memory_space<vmem>>, vector<8x32xf32>,
    %c1_i32 = arith.constant 1 : i32
    %c8_i32_15 = arith.constant 8 : i32
    %37 = arith.muli %c1_i32, %c8_i32_15 : i32
    %38 = tpu.assume_multiple %37, 8 : i32
    %39 = arith.index_cast %38 : i32 to index
    %c0_16 = arith.constant 0 : index
    %40 = vector.load %arg10[%39, %c0_16] : memref<64x128xf32, #tpu.memory_space<vmem>>, vector<8x128xf32>
    %c0_17 = arith.constant 0 : index
    %c0_18 = arith.constant 0 : index
    %41 = vector.load %arg2[%c0_17, %c0_18] : memref<32x128xf32, #tpu.memory_space<vmem>>, vector<32x128xf32>
    %cst_19 = arith.constant dense<0.000000e+00> : vector<8x128xf32>
    %42 = tpu.matmul %34, %41, %cst_19 {dimension_numbers = #tpu.dot_dimension_numbers<[1], [0], [0], [1], [0, 0, 1, 1], [], []>} : vector<8x32xf32>, vector<32x128xf32>, vector<8x128xf32> -> vector<8x128xf32>
    %43 = arith.addf %40, %42 : vector<8x128xf32>
    %44 = arith.negf %43 : vector<8x128xf32>
    %45 = math.exp %44 : vector<8x128xf32>
    %cst_20 = arith.constant 1.000000e+00 : f32
    %46 = vector.broadcast %cst_20 : f32 to vector<8x128xf32>
    %47 = arith.addf %46, %45 : vector<8x128xf32>
    %48 = arith.divf %46, %47 : vector<8x128xf32>
    %49 = vector.extract_strided_slice %48 {offsets = [0, 0], sizes = [8, 32], strides = [1, 1]} : vector<8x128xf32> to vector<8x32xf32>
    %50 = vector.extract_strided_slice %48 {offsets = [0, 32], sizes = [8, 32], strides = [1, 1]} : vector<8x128xf32> to vector<8x32xf32>
    %51 = vector.extract_strided_slice %48 {offsets = [0, 64], sizes = [8, 32], strides = [1, 1]} : vector<8x128xf32> to vector<8x32xf32>
    %52 = vector.extract_strided_slice %48 {offsets = [0, 96], sizes = [8, 32], strides = [1, 1]} : vector<8x128xf32> to vector<8x32xf32>
    %cst_21 = arith.constant 2.000000e+00 : f32
    %53 = vector.broadcast %cst_21 : f32 to vector<8x32xf32>
    %54 = arith.mulf %53, %52 : vector<8x32xf32>
    %cst_22 = arith.constant 1.000000e+00 : f32
    %55 = vector.broadcast %cst_22 : f32 to vector<8x32xf32>
    %56 = arith.subf %54, %55 : vector<8x32xf32>
    %57 = arith.mulf %50, %32 : vector<8x32xf32>
    %58 = arith.mulf %49, %56 : vector<8x32xf32>
    %59 = arith.addf %57, %58 : vector<8x32xf32>
    %60 = math.tanh %59 : vector<8x32xf32>
    %61 = arith.mulf %51, %60 : vector<8x32xf32>
    %62 = arith.index_cast %38 : i32 to index
    %c0_23 = arith.constant 0 : index
    %63 = vector.load %arg11[%62, %c0_23] : memref<64x32xf32, #tpu.memory_space<vmem>>, vector<8x32xf32>
    tpu.vector_store %arg11[%62, %c0_23], %61 {strides = array<i32>} : memref<64x32xf32, #tpu.memory_space<vmem>>, vector<8x32xf32>,
    %c2_i32 = arith.constant 2 : i32
    %c8_i32_24 = arith.constant 8 : i32
    %64 = arith.muli %c2_i32, %c8_i32_24 : i32
    %65 = tpu.assume_multiple %64, 8 : i32
    %66 = arith.index_cast %65 : i32 to index
    %c0_25 = arith.constant 0 : index
    %67 = vector.load %arg10[%66, %c0_25] : memref<64x128xf32, #tpu.memory_space<vmem>>, vector<8x128xf32>
    %c0_26 = arith.constant 0 : index
    %c0_27 = arith.constant 0 : index
    %68 = vector.load %arg2[%c0_26, %c0_27] : memref<32x128xf32, #tpu.memory_space<vmem>>, vector<32x128xf32>
    %cst_28 = arith.constant dense<0.000000e+00> : vector<8x128xf32>
    %69 = tpu.matmul %61, %68, %cst_28 {dimension_numbers = #tpu.dot_dimension_numbers<[1], [0], [0], [1], [0, 0, 1, 1], [], []>} : vector<8x32xf32>, vector<32x128xf32>, vector<8x128xf32> -> vector<8x128xf32>
    %70 = arith.addf %67, %69 : vector<8x128xf32>
    %71 = arith.negf %70 : vector<8x128xf32>
    %72 = math.exp %71 : vector<8x128xf32>
    %cst_29 = arith.constant 1.000000e+00 : f32
    %73 = vector.broadcast %cst_29 : f32 to vector<8x128xf32>
    %74 = arith.addf %73, %72 : vector<8x128xf32>
    %75 = arith.divf %73, %74 : vector<8x128xf32>
    %76 = vector.extract_strided_slice %75 {offsets = [0, 0], sizes = [8, 32], strides = [1, 1]} : vector<8x128xf32> to vector<8x32xf32>
    %77 = vector.extract_strided_slice %75 {offsets = [0, 32], sizes = [8, 32], strides = [1, 1]} : vector<8x128xf32> to vector<8x32xf32>
    %78 = vector.extract_strided_slice %75 {offsets = [0, 64], sizes = [8, 32], strides = [1, 1]} : vector<8x128xf32> to vector<8x32xf32>
    %79 = vector.extract_strided_slice %75 {offsets = [0, 96], sizes = [8, 32], strides = [1, 1]} : vector<8x128xf32> to vector<8x32xf32>
    %cst_30 = arith.constant 2.000000e+00 : f32
    %80 = vector.broadcast %cst_30 : f32 to vector<8x32xf32>
    %81 = arith.mulf %80, %79 : vector<8x32xf32>
    %cst_31 = arith.constant 1.000000e+00 : f32
    %82 = vector.broadcast %cst_31 : f32 to vector<8x32xf32>
    %83 = arith.subf %81, %82 : vector<8x32xf32>
    %84 = arith.mulf %77, %59 : vector<8x32xf32>
    %85 = arith.mulf %76, %83 : vector<8x32xf32>
    %86 = arith.addf %84, %85 : vector<8x32xf32>
    %87 = math.tanh %86 : vector<8x32xf32>
    %88 = arith.mulf %78, %87 : vector<8x32xf32>
    %89 = arith.index_cast %65 : i32 to index
    %c0_32 = arith.constant 0 : index
    %90 = vector.load %arg11[%89, %c0_32] : memref<64x32xf32, #tpu.memory_space<vmem>>, vector<8x32xf32>
    tpu.vector_store %arg11[%89, %c0_32], %88 {strides = array<i32>} : memref<64x32xf32, #tpu.memory_space<vmem>>, vector<8x32xf32>,
    %c3_i32 = arith.constant 3 : i32
    %c8_i32_33 = arith.constant 8 : i32
    %91 = arith.muli %c3_i32, %c8_i32_33 : i32
    %92 = tpu.assume_multiple %91, 8 : i32
    %93 = arith.index_cast %92 : i32 to index
    %c0_34 = arith.constant 0 : index
    %94 = vector.load %arg10[%93, %c0_34] : memref<64x128xf32, #tpu.memory_space<vmem>>, vector<8x128xf32>
    %c0_35 = arith.constant 0 : index
    %c0_36 = arith.constant 0 : index
    %95 = vector.load %arg2[%c0_35, %c0_36] : memref<32x128xf32, #tpu.memory_space<vmem>>, vector<32x128xf32>
    %cst_37 = arith.constant dense<0.000000e+00> : vector<8x128xf32>
    %96 = tpu.matmul %88, %95, %cst_37 {dimension_numbers = #tpu.dot_dimension_numbers<[1], [0], [0], [1], [0, 0, 1, 1], [], []>} : vector<8x32xf32>, vector<32x128xf32>, vector<8x128xf32> -> vector<8x128xf32>
    %97 = arith.addf %94, %96 : vector<8x128xf32>
    %98 = arith.negf %97 : vector<8x128xf32>
    %99 = math.exp %98 : vector<8x128xf32>
    %cst_38 = arith.constant 1.000000e+00 : f32
    %100 = vector.broadcast %cst_38 : f32 to vector<8x128xf32>
    %101 = arith.addf %100, %99 : vector<8x128xf32>
    %102 = arith.divf %100, %101 : vector<8x128xf32>
    %103 = vector.extract_strided_slice %102 {offsets = [0, 0], sizes = [8, 32], strides = [1, 1]} : vector<8x128xf32> to vector<8x32xf32>
    %104 = vector.extract_strided_slice %102 {offsets = [0, 32], sizes = [8, 32], strides = [1, 1]} : vector<8x128xf32> to vector<8x32xf32>
    %105 = vector.extract_strided_slice %102 {offsets = [0, 64], sizes = [8, 32], strides = [1, 1]} : vector<8x128xf32> to vector<8x32xf32>
    %106 = vector.extract_strided_slice %102 {offsets = [0, 96], sizes = [8, 32], strides = [1, 1]} : vector<8x128xf32> to vector<8x32xf32>
    %cst_39 = arith.constant 2.000000e+00 : f32
    %107 = vector.broadcast %cst_39 : f32 to vector<8x32xf32>
    %108 = arith.mulf %107, %106 : vector<8x32xf32>
    %cst_40 = arith.constant 1.000000e+00 : f32
    %109 = vector.broadcast %cst_40 : f32 to vector<8x32xf32>
    %110 = arith.subf %108, %109 : vector<8x32xf32>
    %111 = arith.mulf %104, %86 : vector<8x32xf32>
    %112 = arith.mulf %103, %110 : vector<8x32xf32>
    %113 = arith.addf %111, %112 : vector<8x32xf32>
    %114 = math.tanh %113 : vector<8x32xf32>
    %115 = arith.mulf %105, %114 : vector<8x32xf32>
    %116 = arith.index_cast %92 : i32 to index
    %c0_41 = arith.constant 0 : index
    %117 = vector.load %arg11[%116, %c0_41] : memref<64x32xf32, #tpu.memory_space<vmem>>, vector<8x32xf32>
    tpu.vector_store %arg11[%116, %c0_41], %115 {strides = array<i32>} : memref<64x32xf32, #tpu.memory_space<vmem>>, vector<8x32xf32>,
    %c4_i32 = arith.constant 4 : i32
    %c8_i32_42 = arith.constant 8 : i32
    %118 = arith.muli %c4_i32, %c8_i32_42 : i32
    %119 = tpu.assume_multiple %118, 8 : i32
    %120 = arith.index_cast %119 : i32 to index
    %c0_43 = arith.constant 0 : index
    %121 = vector.load %arg10[%120, %c0_43] : memref<64x128xf32, #tpu.memory_space<vmem>>, vector<8x128xf32>
    %c0_44 = arith.constant 0 : index
    %c0_45 = arith.constant 0 : index
    %122 = vector.load %arg2[%c0_44, %c0_45] : memref<32x128xf32, #tpu.memory_space<vmem>>, vector<32x128xf32>
    %cst_46 = arith.constant dense<0.000000e+00> : vector<8x128xf32>
    %123 = tpu.matmul %115, %122, %cst_46 {dimension_numbers = #tpu.dot_dimension_numbers<[1], [0], [0], [1], [0, 0, 1, 1], [], []>} : vector<8x32xf32>, vector<32x128xf32>, vector<8x128xf32> -> vector<8x128xf32>
    %124 = arith.addf %121, %123 : vector<8x128xf32>
    %125 = arith.negf %124 : vector<8x128xf32>
    %126 = math.exp %125 : vector<8x128xf32>
    %cst_47 = arith.constant 1.000000e+00 : f32
    %127 = vector.broadcast %cst_47 : f32 to vector<8x128xf32>
    %128 = arith.addf %127, %126 : vector<8x128xf32>
    %129 = arith.divf %127, %128 : vector<8x128xf32>
    %130 = vector.extract_strided_slice %129 {offsets = [0, 0], sizes = [8, 32], strides = [1, 1]} : vector<8x128xf32> to vector<8x32xf32>
    %131 = vector.extract_strided_slice %129 {offsets = [0, 32], sizes = [8, 32], strides = [1, 1]} : vector<8x128xf32> to vector<8x32xf32>
    %132 = vector.extract_strided_slice %129 {offsets = [0, 64], sizes = [8, 32], strides = [1, 1]} : vector<8x128xf32> to vector<8x32xf32>
    %133 = vector.extract_strided_slice %129 {offsets = [0, 96], sizes = [8, 32], strides = [1, 1]} : vector<8x128xf32> to vector<8x32xf32>
    %cst_48 = arith.constant 2.000000e+00 : f32
    %134 = vector.broadcast %cst_48 : f32 to vector<8x32xf32>
    %135 = arith.mulf %134, %133 : vector<8x32xf32>
    %cst_49 = arith.constant 1.000000e+00 : f32
    %136 = vector.broadcast %cst_49 : f32 to vector<8x32xf32>
    %137 = arith.subf %135, %136 : vector<8x32xf32>
    %138 = arith.mulf %131, %113 : vector<8x32xf32>
    %139 = arith.mulf %130, %137 : vector<8x32xf32>
    %140 = arith.addf %138, %139 : vector<8x32xf32>
    %141 = math.tanh %140 : vector<8x32xf32>
    %142 = arith.mulf %132, %141 : vector<8x32xf32>
    %143 = arith.index_cast %119 : i32 to index
    %c0_50 = arith.constant 0 : index
    %144 = vector.load %arg11[%143, %c0_50] : memref<64x32xf32, #tpu.memory_space<vmem>>, vector<8x32xf32>
    tpu.vector_store %arg11[%143, %c0_50], %142 {strides = array<i32>} : memref<64x32xf32, #tpu.memory_space<vmem>>, vector<8x32xf32>,
    %c5_i32 = arith.constant 5 : i32
    %c8_i32_51 = arith.constant 8 : i32
    %145 = arith.muli %c5_i32, %c8_i32_51 : i32
    %146 = tpu.assume_multiple %145, 8 : i32
    %147 = arith.index_cast %146 : i32 to index
    %c0_52 = arith.constant 0 : index
    %148 = vector.load %arg10[%147, %c0_52] : memref<64x128xf32, #tpu.memory_space<vmem>>, vector<8x128xf32>
    %c0_53 = arith.constant 0 : index
    %c0_54 = arith.constant 0 : index
    %149 = vector.load %arg2[%c0_53, %c0_54] : memref<32x128xf32, #tpu.memory_space<vmem>>, vector<32x128xf32>
    %cst_55 = arith.constant dense<0.000000e+00> : vector<8x128xf32>
    %150 = tpu.matmul %142, %149, %cst_55 {dimension_numbers = #tpu.dot_dimension_numbers<[1], [0], [0], [1], [0, 0, 1, 1], [], []>} : vector<8x32xf32>, vector<32x128xf32>, vector<8x128xf32> -> vector<8x128xf32>
    %151 = arith.addf %148, %150 : vector<8x128xf32>
    %152 = arith.negf %151 : vector<8x128xf32>
    %153 = math.exp %152 : vector<8x128xf32>
    %cst_56 = arith.constant 1.000000e+00 : f32
    %154 = vector.broadcast %cst_56 : f32 to vector<8x128xf32>
    %155 = arith.addf %154, %153 : vector<8x128xf32>
    %156 = arith.divf %154, %155 : vector<8x128xf32>
    %157 = vector.extract_strided_slice %156 {offsets = [0, 0], sizes = [8, 32], strides = [1, 1]} : vector<8x128xf32> to vector<8x32xf32>
    %158 = vector.extract_strided_slice %156 {offsets = [0, 32], sizes = [8, 32], strides = [1, 1]} : vector<8x128xf32> to vector<8x32xf32>
    %159 = vector.extract_strided_slice %156 {offsets = [0, 64], sizes = [8, 32], strides = [1, 1]} : vector<8x128xf32> to vector<8x32xf32>
    %160 = vector.extract_strided_slice %156 {offsets = [0, 96], sizes = [8, 32], strides = [1, 1]} : vector<8x128xf32> to vector<8x32xf32>
    %cst_57 = arith.constant 2.000000e+00 : f32
    %161 = vector.broadcast %cst_57 : f32 to vector<8x32xf32>
    %162 = arith.mulf %161, %160 : vector<8x32xf32>
    %cst_58 = arith.constant 1.000000e+00 : f32
    %163 = vector.broadcast %cst_58 : f32 to vector<8x32xf32>
    %164 = arith.subf %162, %163 : vector<8x32xf32>
    %165 = arith.mulf %158, %140 : vector<8x32xf32>
    %166 = arith.mulf %157, %164 : vector<8x32xf32>
    %167 = arith.addf %165, %166 : vector<8x32xf32>
    %168 = math.tanh %167 : vector<8x32xf32>
    %169 = arith.mulf %159, %168 : vector<8x32xf32>
    %170 = arith.index_cast %146 : i32 to index
    %c0_59 = arith.constant 0 : index
    %171 = vector.load %arg11[%170, %c0_59] : memref<64x32xf32, #tpu.memory_space<vmem>>, vector<8x32xf32>
    tpu.vector_store %arg11[%170, %c0_59], %169 {strides = array<i32>} : memref<64x32xf32, #tpu.memory_space<vmem>>, vector<8x32xf32>,
    %c6_i32 = arith.constant 6 : i32
    %c8_i32_60 = arith.constant 8 : i32
    %172 = arith.muli %c6_i32, %c8_i32_60 : i32
    %173 = tpu.assume_multiple %172, 8 : i32
    %174 = arith.index_cast %173 : i32 to index
    %c0_61 = arith.constant 0 : index
    %175 = vector.load %arg10[%174, %c0_61] : memref<64x128xf32, #tpu.memory_space<vmem>>, vector<8x128xf32>
    %c0_62 = arith.constant 0 : index
    %c0_63 = arith.constant 0 : index
    %176 = vector.load %arg2[%c0_62, %c0_63] : memref<32x128xf32, #tpu.memory_space<vmem>>, vector<32x128xf32>
    %cst_64 = arith.constant dense<0.000000e+00> : vector<8x128xf32>
    %177 = tpu.matmul %169, %176, %cst_64 {dimension_numbers = #tpu.dot_dimension_numbers<[1], [0], [0], [1], [0, 0, 1, 1], [], []>} : vector<8x32xf32>, vector<32x128xf32>, vector<8x128xf32> -> vector<8x128xf32>
    %178 = arith.addf %175, %177 : vector<8x128xf32>
    %179 = arith.negf %178 : vector<8x128xf32>
    %180 = math.exp %179 : vector<8x128xf32>
    %cst_65 = arith.constant 1.000000e+00 : f32
    %181 = vector.broadcast %cst_65 : f32 to vector<8x128xf32>
    %182 = arith.addf %181, %180 : vector<8x128xf32>
    %183 = arith.divf %181, %182 : vector<8x128xf32>
    %184 = vector.extract_strided_slice %183 {offsets = [0, 0], sizes = [8, 32], strides = [1, 1]} : vector<8x128xf32> to vector<8x32xf32>
    %185 = vector.extract_strided_slice %183 {offsets = [0, 32], sizes = [8, 32], strides = [1, 1]} : vector<8x128xf32> to vector<8x32xf32>
    %186 = vector.extract_strided_slice %183 {offsets = [0, 64], sizes = [8, 32], strides = [1, 1]} : vector<8x128xf32> to vector<8x32xf32>
    %187 = vector.extract_strided_slice %183 {offsets = [0, 96], sizes = [8, 32], strides = [1, 1]} : vector<8x128xf32> to vector<8x32xf32>
    %cst_66 = arith.constant 2.000000e+00 : f32
    %188 = vector.broadcast %cst_66 : f32 to vector<8x32xf32>
    %189 = arith.mulf %188, %187 : vector<8x32xf32>
    %cst_67 = arith.constant 1.000000e+00 : f32
    %190 = vector.broadcast %cst_67 : f32 to vector<8x32xf32>
    %191 = arith.subf %189, %190 : vector<8x32xf32>
    %192 = arith.mulf %185, %167 : vector<8x32xf32>
    %193 = arith.mulf %184, %191 : vector<8x32xf32>
    %194 = arith.addf %192, %193 : vector<8x32xf32>
    %195 = math.tanh %194 : vector<8x32xf32>
    %196 = arith.mulf %186, %195 : vector<8x32xf32>
    %197 = arith.index_cast %173 : i32 to index
    %c0_68 = arith.constant 0 : index
    %198 = vector.load %arg11[%197, %c0_68] : memref<64x32xf32, #tpu.memory_space<vmem>>, vector<8x32xf32>
    tpu.vector_store %arg11[%197, %c0_68], %196 {strides = array<i32>} : memref<64x32xf32, #tpu.memory_space<vmem>>, vector<8x32xf32>,
    %c7_i32 = arith.constant 7 : i32
    %c8_i32_69 = arith.constant 8 : i32
    %199 = arith.muli %c7_i32, %c8_i32_69 : i32
    %200 = tpu.assume_multiple %199, 8 : i32
    %201 = arith.index_cast %200 : i32 to index
    %c0_70 = arith.constant 0 : index
    %202 = vector.load %arg10[%201, %c0_70] : memref<64x128xf32, #tpu.memory_space<vmem>>, vector<8x128xf32>
    %c0_71 = arith.constant 0 : index
    %c0_72 = arith.constant 0 : index
    %203 = vector.load %arg2[%c0_71, %c0_72] : memref<32x128xf32, #tpu.memory_space<vmem>>, vector<32x128xf32>
    %cst_73 = arith.constant dense<0.000000e+00> : vector<8x128xf32>
    %204 = tpu.matmul %196, %203, %cst_73 {dimension_numbers = #tpu.dot_dimension_numbers<[1], [0], [0], [1], [0, 0, 1, 1], [], []>} : vector<8x32xf32>, vector<32x128xf32>, vector<8x128xf32> -> vector<8x128xf32>
    %205 = arith.addf %202, %204 : vector<8x128xf32>
    %206 = arith.negf %205 : vector<8x128xf32>
    %207 = math.exp %206 : vector<8x128xf32>
    %cst_74 = arith.constant 1.000000e+00 : f32
    %208 = vector.broadcast %cst_74 : f32 to vector<8x128xf32>
    %209 = arith.addf %208, %207 : vector<8x128xf32>
    %210 = arith.divf %208, %209 : vector<8x128xf32>
    %211 = vector.extract_strided_slice %210 {offsets = [0, 0], sizes = [8, 32], strides = [1, 1]} : vector<8x128xf32> to vector<8x32xf32>
    %212 = vector.extract_strided_slice %210 {offsets = [0, 32], sizes = [8, 32], strides = [1, 1]} : vector<8x128xf32> to vector<8x32xf32>
    %213 = vector.extract_strided_slice %210 {offsets = [0, 64], sizes = [8, 32], strides = [1, 1]} : vector<8x128xf32> to vector<8x32xf32>
    %214 = vector.extract_strided_slice %210 {offsets = [0, 96], sizes = [8, 32], strides = [1, 1]} : vector<8x128xf32> to vector<8x32xf32>
    %cst_75 = arith.constant 2.000000e+00 : f32
    %215 = vector.broadcast %cst_75 : f32 to vector<8x32xf32>
    %216 = arith.mulf %215, %214 : vector<8x32xf32>
    %cst_76 = arith.constant 1.000000e+00 : f32
    %217 = vector.broadcast %cst_76 : f32 to vector<8x32xf32>
    %218 = arith.subf %216, %217 : vector<8x32xf32>
    %219 = arith.mulf %212, %194 : vector<8x32xf32>
    %220 = arith.mulf %211, %218 : vector<8x32xf32>
    %221 = arith.addf %219, %220 : vector<8x32xf32>
    %222 = math.tanh %221 : vector<8x32xf32>
    %223 = arith.mulf %213, %222 : vector<8x32xf32>
    %224 = arith.index_cast %200 : i32 to index
    %c0_77 = arith.constant 0 : index
    %225 = vector.load %arg11[%224, %c0_77] : memref<64x32xf32, #tpu.memory_space<vmem>>, vector<8x32xf32>
    tpu.vector_store %arg11[%224, %c0_77], %223 {strides = array<i32>} : memref<64x32xf32, #tpu.memory_space<vmem>>, vector<8x32xf32>,
    %c8_i32_78 = arith.constant 8 : i32
    %c0_79 = arith.constant 0 : index
    %c0_80 = arith.constant 0 : index
    %226 = vector.load %arg11[%c0_79, %c0_80] : memref<64x32xf32, #tpu.memory_space<vmem>>, vector<64x32xf32>
    %c0_81 = arith.constant 0 : index
    %c0_82 = arith.constant 0 : index
    %227 = vector.load %arg4[%c0_81, %c0_82] : memref<32x128xf32, #tpu.memory_space<vmem>>, vector<32x128xf32>
    %cst_83 = arith.constant dense<0.000000e+00> : vector<64x128xf32>
    %228 = tpu.matmul %226, %227, %cst_83 {dimension_numbers = #tpu.dot_dimension_numbers<[1], [0], [0], [1], [0, 0, 1, 1], [], []>} : vector<64x32xf32>, vector<32x128xf32>, vector<64x128xf32> -> vector<64x128xf32>
    %c0_84 = arith.constant 0 : index
    %c0_85 = arith.constant 0 : index
    %229 = vector.load %arg6[%c0_84, %c0_85] : memref<1x128xf32, #tpu.memory_space<vmem>>, vector<1x128xf32>
    %230 = vector.broadcast %229 : vector<1x128xf32> to vector<64x128xf32>
    %231 = arith.addf %228, %230 : vector<64x128xf32>
    %c0_86 = arith.constant 0 : index
    %c0_87 = arith.constant 0 : index
    %232 = vector.load %arg10[%c0_86, %c0_87] : memref<64x128xf32, #tpu.memory_space<vmem>>, vector<64x128xf32>
    tpu.vector_store %arg10[%c0_86, %c0_87], %231 {strides = array<i32>} : memref<64x128xf32, #tpu.memory_space<vmem>>, vector<64x128xf32>,
    %c0_i32_88 = arith.constant 0 : i32
    %c8_i32_89 = arith.constant 8 : i32
    %233 = arith.muli %c0_i32_88, %c8_i32_89 : i32
    %234 = tpu.assume_multiple %233, 8 : i32
    %235 = arith.index_cast %234 : i32 to index
    %c0_90 = arith.constant 0 : index
    %236 = vector.load %arg10[%235, %c0_90] : memref<64x128xf32, #tpu.memory_space<vmem>>, vector<8x128xf32>
    %c0_91 = arith.constant 0 : index
    %c0_92 = arith.constant 0 : index
    %237 = vector.load %arg5[%c0_91, %c0_92] : memref<32x128xf32, #tpu.memory_space<vmem>>, vector<32x128xf32>
    %cst_93 = arith.constant dense<0.000000e+00> : vector<8x128xf32>
    %238 = tpu.matmul %0, %237, %cst_93 {dimension_numbers = #tpu.dot_dimension_numbers<[1], [0], [0], [1], [0, 0, 1, 1], [], []>} : vector<8x32xf32>, vector<32x128xf32>, vector<8x128xf32> -> vector<8x128xf32>
    %239 = arith.addf %236, %238 : vector<8x128xf32>
    %240 = arith.negf %239 : vector<8x128xf32>
    %241 = math.exp %240 : vector<8x128xf32>
    %cst_94 = arith.constant 1.000000e+00 : f32
    %242 = vector.broadcast %cst_94 : f32 to vector<8x128xf32>
    %243 = arith.addf %242, %241 : vector<8x128xf32>
    %244 = arith.divf %242, %243 : vector<8x128xf32>
    %245 = vector.extract_strided_slice %244 {offsets = [0, 0], sizes = [8, 32], strides = [1, 1]} : vector<8x128xf32> to vector<8x32xf32>
    %246 = vector.extract_strided_slice %244 {offsets = [0, 32], sizes = [8, 32], strides = [1, 1]} : vector<8x128xf32> to vector<8x32xf32>
    %247 = vector.extract_strided_slice %244 {offsets = [0, 64], sizes = [8, 32], strides = [1, 1]} : vector<8x128xf32> to vector<8x32xf32>
    %248 = vector.extract_strided_slice %244 {offsets = [0, 96], sizes = [8, 32], strides = [1, 1]} : vector<8x128xf32> to vector<8x32xf32>
    %cst_95 = arith.constant 2.000000e+00 : f32
    %249 = vector.broadcast %cst_95 : f32 to vector<8x32xf32>
    %250 = arith.mulf %249, %248 : vector<8x32xf32>
    %cst_96 = arith.constant 1.000000e+00 : f32
    %251 = vector.broadcast %cst_96 : f32 to vector<8x32xf32>
    %252 = arith.subf %250, %251 : vector<8x32xf32>
    %253 = arith.mulf %246, %0 : vector<8x32xf32>
    %254 = arith.mulf %245, %252 : vector<8x32xf32>
    %255 = arith.addf %253, %254 : vector<8x32xf32>
    %256 = math.tanh %255 : vector<8x32xf32>
    %257 = arith.mulf %247, %256 : vector<8x32xf32>
    %c1_i32_97 = arith.constant 1 : i32
    %c8_i32_98 = arith.constant 8 : i32
    %258 = arith.muli %c1_i32_97, %c8_i32_98 : i32
    %259 = tpu.assume_multiple %258, 8 : i32
    %260 = arith.index_cast %259 : i32 to index
    %c0_99 = arith.constant 0 : index
    %261 = vector.load %arg10[%260, %c0_99] : memref<64x128xf32, #tpu.memory_space<vmem>>, vector<8x128xf32>
    %c0_100 = arith.constant 0 : index
    %c0_101 = arith.constant 0 : index
    %262 = vector.load %arg5[%c0_100, %c0_101] : memref<32x128xf32, #tpu.memory_space<vmem>>, vector<32x128xf32>
    %cst_102 = arith.constant dense<0.000000e+00> : vector<8x128xf32>
    %263 = tpu.matmul %257, %262, %cst_102 {dimension_numbers = #tpu.dot_dimension_numbers<[1], [0], [0], [1], [0, 0, 1, 1], [], []>} : vector<8x32xf32>, vector<32x128xf32>, vector<8x128xf32> -> vector<8x128xf32>
    %264 = arith.addf %261, %263 : vector<8x128xf32>
    %265 = arith.negf %264 : vector<8x128xf32>
    %266 = math.exp %265 : vector<8x128xf32>
    %cst_103 = arith.constant 1.000000e+00 : f32
    %267 = vector.broadcast %cst_103 : f32 to vector<8x128xf32>
    %268 = arith.addf %267, %266 : vector<8x128xf32>
    %269 = arith.divf %267, %268 : vector<8x128xf32>
    %270 = vector.extract_strided_slice %269 {offsets = [0, 0], sizes = [8, 32], strides = [1, 1]} : vector<8x128xf32> to vector<8x32xf32>
    %271 = vector.extract_strided_slice %269 {offsets = [0, 32], sizes = [8, 32], strides = [1, 1]} : vector<8x128xf32> to vector<8x32xf32>
    %272 = vector.extract_strided_slice %269 {offsets = [0, 64], sizes = [8, 32], strides = [1, 1]} : vector<8x128xf32> to vector<8x32xf32>
    %273 = vector.extract_strided_slice %269 {offsets = [0, 96], sizes = [8, 32], strides = [1, 1]} : vector<8x128xf32> to vector<8x32xf32>
    %cst_104 = arith.constant 2.000000e+00 : f32
    %274 = vector.broadcast %cst_104 : f32 to vector<8x32xf32>
    %275 = arith.mulf %274, %273 : vector<8x32xf32>
    %cst_105 = arith.constant 1.000000e+00 : f32
    %276 = vector.broadcast %cst_105 : f32 to vector<8x32xf32>
    %277 = arith.subf %275, %276 : vector<8x32xf32>
    %278 = arith.mulf %271, %255 : vector<8x32xf32>
    %279 = arith.mulf %270, %277 : vector<8x32xf32>
    %280 = arith.addf %278, %279 : vector<8x32xf32>
    %281 = math.tanh %280 : vector<8x32xf32>
    %282 = arith.mulf %272, %281 : vector<8x32xf32>
    %c2_i32_106 = arith.constant 2 : i32
    %c8_i32_107 = arith.constant 8 : i32
    %283 = arith.muli %c2_i32_106, %c8_i32_107 : i32
    %284 = tpu.assume_multiple %283, 8 : i32
    %285 = arith.index_cast %284 : i32 to index
    %c0_108 = arith.constant 0 : index
    %286 = vector.load %arg10[%285, %c0_108] : memref<64x128xf32, #tpu.memory_space<vmem>>, vector<8x128xf32>
    %c0_109 = arith.constant 0 : index
    %c0_110 = arith.constant 0 : index
    %287 = vector.load %arg5[%c0_109, %c0_110] : memref<32x128xf32, #tpu.memory_space<vmem>>, vector<32x128xf32>
    %cst_111 = arith.constant dense<0.000000e+00> : vector<8x128xf32>
    %288 = tpu.matmul %282, %287, %cst_111 {dimension_numbers = #tpu.dot_dimension_numbers<[1], [0], [0], [1], [0, 0, 1, 1], [], []>} : vector<8x32xf32>, vector<32x128xf32>, vector<8x128xf32> -> vector<8x128xf32>
    %289 = arith.addf %286, %288 : vector<8x128xf32>
    %290 = arith.negf %289 : vector<8x128xf32>
    %291 = math.exp %290 : vector<8x128xf32>
    %cst_112 = arith.constant 1.000000e+00 : f32
    %292 = vector.broadcast %cst_112 : f32 to vector<8x128xf32>
    %293 = arith.addf %292, %291 : vector<8x128xf32>
    %294 = arith.divf %292, %293 : vector<8x128xf32>
    %295 = vector.extract_strided_slice %294 {offsets = [0, 0], sizes = [8, 32], strides = [1, 1]} : vector<8x128xf32> to vector<8x32xf32>
    %296 = vector.extract_strided_slice %294 {offsets = [0, 32], sizes = [8, 32], strides = [1, 1]} : vector<8x128xf32> to vector<8x32xf32>
    %297 = vector.extract_strided_slice %294 {offsets = [0, 64], sizes = [8, 32], strides = [1, 1]} : vector<8x128xf32> to vector<8x32xf32>
    %298 = vector.extract_strided_slice %294 {offsets = [0, 96], sizes = [8, 32], strides = [1, 1]} : vector<8x128xf32> to vector<8x32xf32>
    %cst_113 = arith.constant 2.000000e+00 : f32
    %299 = vector.broadcast %cst_113 : f32 to vector<8x32xf32>
    %300 = arith.mulf %299, %298 : vector<8x32xf32>
    %cst_114 = arith.constant 1.000000e+00 : f32
    %301 = vector.broadcast %cst_114 : f32 to vector<8x32xf32>
    %302 = arith.subf %300, %301 : vector<8x32xf32>
    %303 = arith.mulf %296, %280 : vector<8x32xf32>
    %304 = arith.mulf %295, %302 : vector<8x32xf32>
    %305 = arith.addf %303, %304 : vector<8x32xf32>
    %306 = math.tanh %305 : vector<8x32xf32>
    %307 = arith.mulf %297, %306 : vector<8x32xf32>
    %c3_i32_115 = arith.constant 3 : i32
    %c8_i32_116 = arith.constant 8 : i32
    %308 = arith.muli %c3_i32_115, %c8_i32_116 : i32
    %309 = tpu.assume_multiple %308, 8 : i32
    %310 = arith.index_cast %309 : i32 to index
    %c0_117 = arith.constant 0 : index
    %311 = vector.load %arg10[%310, %c0_117] : memref<64x128xf32, #tpu.memory_space<vmem>>, vector<8x128xf32>
    %c0_118 = arith.constant 0 : index
    %c0_119 = arith.constant 0 : index
    %312 = vector.load %arg5[%c0_118, %c0_119] : memref<32x128xf32, #tpu.memory_space<vmem>>, vector<32x128xf32>
    %cst_120 = arith.constant dense<0.000000e+00> : vector<8x128xf32>
    %313 = tpu.matmul %307, %312, %cst_120 {dimension_numbers = #tpu.dot_dimension_numbers<[1], [0], [0], [1], [0, 0, 1, 1], [], []>} : vector<8x32xf32>, vector<32x128xf32>, vector<8x128xf32> -> vector<8x128xf32>
    %314 = arith.addf %311, %313 : vector<8x128xf32>
    %315 = arith.negf %314 : vector<8x128xf32>
    %316 = math.exp %315 : vector<8x128xf32>
    %cst_121 = arith.constant 1.000000e+00 : f32
    %317 = vector.broadcast %cst_121 : f32 to vector<8x128xf32>
    %318 = arith.addf %317, %316 : vector<8x128xf32>
    %319 = arith.divf %317, %318 : vector<8x128xf32>
    %320 = vector.extract_strided_slice %319 {offsets = [0, 0], sizes = [8, 32], strides = [1, 1]} : vector<8x128xf32> to vector<8x32xf32>
    %321 = vector.extract_strided_slice %319 {offsets = [0, 32], sizes = [8, 32], strides = [1, 1]} : vector<8x128xf32> to vector<8x32xf32>
    %322 = vector.extract_strided_slice %319 {offsets = [0, 64], sizes = [8, 32], strides = [1, 1]} : vector<8x128xf32> to vector<8x32xf32>
    %323 = vector.extract_strided_slice %319 {offsets = [0, 96], sizes = [8, 32], strides = [1, 1]} : vector<8x128xf32> to vector<8x32xf32>
    %cst_122 = arith.constant 2.000000e+00 : f32
    %324 = vector.broadcast %cst_122 : f32 to vector<8x32xf32>
    %325 = arith.mulf %324, %323 : vector<8x32xf32>
    %cst_123 = arith.constant 1.000000e+00 : f32
    %326 = vector.broadcast %cst_123 : f32 to vector<8x32xf32>
    %327 = arith.subf %325, %326 : vector<8x32xf32>
    %328 = arith.mulf %321, %305 : vector<8x32xf32>
    %329 = arith.mulf %320, %327 : vector<8x32xf32>
    %330 = arith.addf %328, %329 : vector<8x32xf32>
    %331 = math.tanh %330 : vector<8x32xf32>
    %332 = arith.mulf %322, %331 : vector<8x32xf32>
    %c4_i32_124 = arith.constant 4 : i32
    %c8_i32_125 = arith.constant 8 : i32
    %333 = arith.muli %c4_i32_124, %c8_i32_125 : i32
    %334 = tpu.assume_multiple %333, 8 : i32
    %335 = arith.index_cast %334 : i32 to index
    %c0_126 = arith.constant 0 : index
    %336 = vector.load %arg10[%335, %c0_126] : memref<64x128xf32, #tpu.memory_space<vmem>>, vector<8x128xf32>
    %c0_127 = arith.constant 0 : index
    %c0_128 = arith.constant 0 : index
    %337 = vector.load %arg5[%c0_127, %c0_128] : memref<32x128xf32, #tpu.memory_space<vmem>>, vector<32x128xf32>
    %cst_129 = arith.constant dense<0.000000e+00> : vector<8x128xf32>
    %338 = tpu.matmul %332, %337, %cst_129 {dimension_numbers = #tpu.dot_dimension_numbers<[1], [0], [0], [1], [0, 0, 1, 1], [], []>} : vector<8x32xf32>, vector<32x128xf32>, vector<8x128xf32> -> vector<8x128xf32>
    %339 = arith.addf %336, %338 : vector<8x128xf32>
    %340 = arith.negf %339 : vector<8x128xf32>
    %341 = math.exp %340 : vector<8x128xf32>
    %cst_130 = arith.constant 1.000000e+00 : f32
    %342 = vector.broadcast %cst_130 : f32 to vector<8x128xf32>
    %343 = arith.addf %342, %341 : vector<8x128xf32>
    %344 = arith.divf %342, %343 : vector<8x128xf32>
    %345 = vector.extract_strided_slice %344 {offsets = [0, 0], sizes = [8, 32], strides = [1, 1]} : vector<8x128xf32> to vector<8x32xf32>
    %346 = vector.extract_strided_slice %344 {offsets = [0, 32], sizes = [8, 32], strides = [1, 1]} : vector<8x128xf32> to vector<8x32xf32>
    %347 = vector.extract_strided_slice %344 {offsets = [0, 64], sizes = [8, 32], strides = [1, 1]} : vector<8x128xf32> to vector<8x32xf32>
    %348 = vector.extract_strided_slice %344 {offsets = [0, 96], sizes = [8, 32], strides = [1, 1]} : vector<8x128xf32> to vector<8x32xf32>
    %cst_131 = arith.constant 2.000000e+00 : f32
    %349 = vector.broadcast %cst_131 : f32 to vector<8x32xf32>
    %350 = arith.mulf %349, %348 : vector<8x32xf32>
    %cst_132 = arith.constant 1.000000e+00 : f32
    %351 = vector.broadcast %cst_132 : f32 to vector<8x32xf32>
    %352 = arith.subf %350, %351 : vector<8x32xf32>
    %353 = arith.mulf %346, %330 : vector<8x32xf32>
    %354 = arith.mulf %345, %352 : vector<8x32xf32>
    %355 = arith.addf %353, %354 : vector<8x32xf32>
    %356 = math.tanh %355 : vector<8x32xf32>
    %357 = arith.mulf %347, %356 : vector<8x32xf32>
    %c5_i32_133 = arith.constant 5 : i32
    %c8_i32_134 = arith.constant 8 : i32
    %358 = arith.muli %c5_i32_133, %c8_i32_134 : i32
    %359 = tpu.assume_multiple %358, 8 : i32
    %360 = arith.index_cast %359 : i32 to index
    %c0_135 = arith.constant 0 : index
    %361 = vector.load %arg10[%360, %c0_135] : memref<64x128xf32, #tpu.memory_space<vmem>>, vector<8x128xf32>
    %c0_136 = arith.constant 0 : index
    %c0_137 = arith.constant 0 : index
    %362 = vector.load %arg5[%c0_136, %c0_137] : memref<32x128xf32, #tpu.memory_space<vmem>>, vector<32x128xf32>
    %cst_138 = arith.constant dense<0.000000e+00> : vector<8x128xf32>
    %363 = tpu.matmul %357, %362, %cst_138 {dimension_numbers = #tpu.dot_dimension_numbers<[1], [0], [0], [1], [0, 0, 1, 1], [], []>} : vector<8x32xf32>, vector<32x128xf32>, vector<8x128xf32> -> vector<8x128xf32>
    %364 = arith.addf %361, %363 : vector<8x128xf32>
    %365 = arith.negf %364 : vector<8x128xf32>
    %366 = math.exp %365 : vector<8x128xf32>
    %cst_139 = arith.constant 1.000000e+00 : f32
    %367 = vector.broadcast %cst_139 : f32 to vector<8x128xf32>
    %368 = arith.addf %367, %366 : vector<8x128xf32>
    %369 = arith.divf %367, %368 : vector<8x128xf32>
    %370 = vector.extract_strided_slice %369 {offsets = [0, 0], sizes = [8, 32], strides = [1, 1]} : vector<8x128xf32> to vector<8x32xf32>
    %371 = vector.extract_strided_slice %369 {offsets = [0, 32], sizes = [8, 32], strides = [1, 1]} : vector<8x128xf32> to vector<8x32xf32>
    %372 = vector.extract_strided_slice %369 {offsets = [0, 64], sizes = [8, 32], strides = [1, 1]} : vector<8x128xf32> to vector<8x32xf32>
    %373 = vector.extract_strided_slice %369 {offsets = [0, 96], sizes = [8, 32], strides = [1, 1]} : vector<8x128xf32> to vector<8x32xf32>
    %cst_140 = arith.constant 2.000000e+00 : f32
    %374 = vector.broadcast %cst_140 : f32 to vector<8x32xf32>
    %375 = arith.mulf %374, %373 : vector<8x32xf32>
    %cst_141 = arith.constant 1.000000e+00 : f32
    %376 = vector.broadcast %cst_141 : f32 to vector<8x32xf32>
    %377 = arith.subf %375, %376 : vector<8x32xf32>
    %378 = arith.mulf %371, %355 : vector<8x32xf32>
    %379 = arith.mulf %370, %377 : vector<8x32xf32>
    %380 = arith.addf %378, %379 : vector<8x32xf32>
    %381 = math.tanh %380 : vector<8x32xf32>
    %382 = arith.mulf %372, %381 : vector<8x32xf32>
    %c6_i32_142 = arith.constant 6 : i32
    %c8_i32_143 = arith.constant 8 : i32
    %383 = arith.muli %c6_i32_142, %c8_i32_143 : i32
    %384 = tpu.assume_multiple %383, 8 : i32
    %385 = arith.index_cast %384 : i32 to index
    %c0_144 = arith.constant 0 : index
    %386 = vector.load %arg10[%385, %c0_144] : memref<64x128xf32, #tpu.memory_space<vmem>>, vector<8x128xf32>
    %c0_145 = arith.constant 0 : index
    %c0_146 = arith.constant 0 : index
    %387 = vector.load %arg5[%c0_145, %c0_146] : memref<32x128xf32, #tpu.memory_space<vmem>>, vector<32x128xf32>
    %cst_147 = arith.constant dense<0.000000e+00> : vector<8x128xf32>
    %388 = tpu.matmul %382, %387, %cst_147 {dimension_numbers = #tpu.dot_dimension_numbers<[1], [0], [0], [1], [0, 0, 1, 1], [], []>} : vector<8x32xf32>, vector<32x128xf32>, vector<8x128xf32> -> vector<8x128xf32>
    %389 = arith.addf %386, %388 : vector<8x128xf32>
    %390 = arith.negf %389 : vector<8x128xf32>
    %391 = math.exp %390 : vector<8x128xf32>
    %cst_148 = arith.constant 1.000000e+00 : f32
    %392 = vector.broadcast %cst_148 : f32 to vector<8x128xf32>
    %393 = arith.addf %392, %391 : vector<8x128xf32>
    %394 = arith.divf %392, %393 : vector<8x128xf32>
    %395 = vector.extract_strided_slice %394 {offsets = [0, 0], sizes = [8, 32], strides = [1, 1]} : vector<8x128xf32> to vector<8x32xf32>
    %396 = vector.extract_strided_slice %394 {offsets = [0, 32], sizes = [8, 32], strides = [1, 1]} : vector<8x128xf32> to vector<8x32xf32>
    %397 = vector.extract_strided_slice %394 {offsets = [0, 64], sizes = [8, 32], strides = [1, 1]} : vector<8x128xf32> to vector<8x32xf32>
    %398 = vector.extract_strided_slice %394 {offsets = [0, 96], sizes = [8, 32], strides = [1, 1]} : vector<8x128xf32> to vector<8x32xf32>
    %cst_149 = arith.constant 2.000000e+00 : f32
    %399 = vector.broadcast %cst_149 : f32 to vector<8x32xf32>
    %400 = arith.mulf %399, %398 : vector<8x32xf32>
    %cst_150 = arith.constant 1.000000e+00 : f32
    %401 = vector.broadcast %cst_150 : f32 to vector<8x32xf32>
    %402 = arith.subf %400, %401 : vector<8x32xf32>
    %403 = arith.mulf %396, %380 : vector<8x32xf32>
    %404 = arith.mulf %395, %402 : vector<8x32xf32>
    %405 = arith.addf %403, %404 : vector<8x32xf32>
    %406 = math.tanh %405 : vector<8x32xf32>
    %407 = arith.mulf %397, %406 : vector<8x32xf32>
    %c7_i32_151 = arith.constant 7 : i32
    %c8_i32_152 = arith.constant 8 : i32
    %408 = arith.muli %c7_i32_151, %c8_i32_152 : i32
    %409 = tpu.assume_multiple %408, 8 : i32
    %410 = arith.index_cast %409 : i32 to index
    %c0_153 = arith.constant 0 : index
    %411 = vector.load %arg10[%410, %c0_153] : memref<64x128xf32, #tpu.memory_space<vmem>>, vector<8x128xf32>
    %c0_154 = arith.constant 0 : index
    %c0_155 = arith.constant 0 : index
    %412 = vector.load %arg5[%c0_154, %c0_155] : memref<32x128xf32, #tpu.memory_space<vmem>>, vector<32x128xf32>
    %cst_156 = arith.constant dense<0.000000e+00> : vector<8x128xf32>
    %413 = tpu.matmul %407, %412, %cst_156 {dimension_numbers = #tpu.dot_dimension_numbers<[1], [0], [0], [1], [0, 0, 1, 1], [], []>} : vector<8x32xf32>, vector<32x128xf32>, vector<8x128xf32> -> vector<8x128xf32>
    %414 = arith.addf %411, %413 : vector<8x128xf32>
    %415 = arith.negf %414 : vector<8x128xf32>
    %416 = math.exp %415 : vector<8x128xf32>
    %cst_157 = arith.constant 1.000000e+00 : f32
    %417 = vector.broadcast %cst_157 : f32 to vector<8x128xf32>
    %418 = arith.addf %417, %416 : vector<8x128xf32>
    %419 = arith.divf %417, %418 : vector<8x128xf32>
    %420 = vector.extract_strided_slice %419 {offsets = [0, 0], sizes = [8, 32], strides = [1, 1]} : vector<8x128xf32> to vector<8x32xf32>
    %421 = vector.extract_strided_slice %419 {offsets = [0, 32], sizes = [8, 32], strides = [1, 1]} : vector<8x128xf32> to vector<8x32xf32>
    %422 = vector.extract_strided_slice %419 {offsets = [0, 64], sizes = [8, 32], strides = [1, 1]} : vector<8x128xf32> to vector<8x32xf32>
    %423 = vector.extract_strided_slice %419 {offsets = [0, 96], sizes = [8, 32], strides = [1, 1]} : vector<8x128xf32> to vector<8x32xf32>
    %cst_158 = arith.constant 2.000000e+00 : f32
    %424 = vector.broadcast %cst_158 : f32 to vector<8x32xf32>
    %425 = arith.mulf %424, %423 : vector<8x32xf32>
    %cst_159 = arith.constant 1.000000e+00 : f32
    %426 = vector.broadcast %cst_159 : f32 to vector<8x32xf32>
    %427 = arith.subf %425, %426 : vector<8x32xf32>
    %428 = arith.mulf %421, %405 : vector<8x32xf32>
    %429 = arith.mulf %420, %427 : vector<8x32xf32>
    %430 = arith.addf %428, %429 : vector<8x32xf32>
    %431 = math.tanh %430 : vector<8x32xf32>
    %432 = arith.mulf %422, %431 : vector<8x32xf32>
    %c8_i32_160 = arith.constant 8 : i32
    %c0_161 = arith.constant 0 : index
    %c0_162 = arith.constant 0 : index
    %433 = vector.load %arg7[%c0_161, %c0_162] : memref<32x1xf32, #tpu.memory_space<vmem>>, vector<32x1xf32>
    %cst_163 = arith.constant dense<0.000000e+00> : vector<8x1xf32>
    %434 = tpu.matmul %432, %433, %cst_163 {dimension_numbers = #tpu.dot_dimension_numbers<[1], [0], [0], [1], [0, 0, 1, 1], [], []>} : vector<8x32xf32>, vector<32x1xf32>, vector<8x1xf32> -> vector<8x1xf32>
    %c0_164 = arith.constant 0 : index
    %c0_165 = arith.constant 0 : index
    %435 = vector.load %arg8[%c0_164, %c0_165] : memref<1x1xf32, #tpu.memory_space<vmem>>, vector<1x1xf32>
    %436 = vector.broadcast %435 : vector<1x1xf32> to vector<8x1xf32>
    %437 = arith.addf %434, %436 : vector<8x1xf32>
    %c0_166 = arith.constant 0 : index
    %c0_167 = arith.constant 0 : index
    %438 = vector.load %arg9[%c0_166, %c0_167] : memref<8x1xf32, #tpu.memory_space<vmem>>, vector<8x1xf32>
    tpu.vector_store %arg9[%c0_166, %c0_167], %437 {strides = array<i32>} : memref<8x1xf32, #tpu.memory_space<vmem>>, vector<8x1xf32>,
    return
  }
}

</mosaic_0001>

<llo_original>
// kernel: lstm_forward.1
$region0: #{lstm_forward.1}
  #allocation0 [shape = 'u32[]', space=smem, size = 0x4, offset = 0x4, fixed_abs, tag = 'smem constant byte address 0x4 - core index']
  #allocation1 [shape = 'u32[144,128]{1,0:T(1,128)}', space=vmem, size = 0x12000, scoped, tag = 'internal scratch']
  #allocation2 [shape = 'f32[64,128]{1,0:T(8,128)}', space=vmem, size = 0x8000, scoped, tag = 'scratch operand']
  #allocation3 [shape = 'f32[64,32]{1,0:T(8,128)}', space=vmem, size = 0x8000, scoped, tag = 'scratch operand']
  #allocation4 [shape = 'f32[1,1]{1,0:T(1,128)S(1)}', space=vmem, size = 0x200, scoped, tag = 'scoped memory for lstm_forward.1']
  %s0 = inlined_call_operand.vmem [shape: f32[64,1], index: 0, kind: input, shape index: {}]
  %s1 = inlined_call_operand.vmem [shape: f32[1,128], index: 1, kind: input, shape index: {}]
  %s2 = inlined_call_operand.vmem [shape: f32[32,128], index: 2, kind: input, shape index: {}]
  %s3 = inlined_call_operand.vmem [shape: f32[1,128], index: 3, kind: input, shape index: {}]
  %s4 = inlined_call_operand.vmem [shape: f32[32,128], index: 4, kind: input, shape index: {}]
  %s5 = inlined_call_operand.vmem [shape: f32[32,128], index: 5, kind: input, shape index: {}]
  %s6 = inlined_call_operand.vmem [shape: f32[1,128], index: 6, kind: input, shape index: {}]
  %s7 = inlined_call_operand.vmem [shape: f32[32,1], index: 7, kind: input, shape index: {}]
  %s8 = inlined_call_operand.<no memory space> [shape: f32[1,1], index: 8, kind: input, shape index: {}]
  %s9 = inlined_call_operand.vmem [shape: f32[8,1], index: 9, kind: output, shape index: {}]
  %s10 = sld [smem:[#allocation0]]
  $region46: #{lstm_forward.1} parent=0
    _
  %s12 = ssub.s32 1, %s10
  %s13 = scalar_select 0, %s12, %s10
  %v14 = vstv %s8
  %15 = vst [vmem:[#allocation4] sm:$0x1] %v14
  // Predicated region
  $region2: #{lstm_forward.1} parent=0 // pred_check
    _
  $region3: #{lstm_forward.1} parent=0 // pred_check_branch
    %17 = sbr.rel (0) target = $region5
  $region4: #{lstm_forward.1} parent=0 // pred_region
    _
  $region5: #{lstm_forward.1} parent=0 // pred_fallthru
    _
  // Predicated region
  $region6: #{lstm_forward.1} parent=0 // pred_check
    _
  $region7: #{lstm_forward.1} parent=0 // pred_check_branch
    %19 = sbr.rel (0) target = $region9
  $region8: #{lstm_forward.1} parent=0 // pred_region
    _
  $region9: #{lstm_forward.1} parent=0 // pred_fallthru
    _
  // Predicated region
  $region10: #{lstm_forward.1} parent=0 // pred_check
    _
  $region11: #{lstm_forward.1} parent=0 // pred_check_branch
    %21 = sbr.rel (0) target = $region13
  $region12: #{lstm_forward.1} parent=0 // pred_region
    _
  $region13: #{lstm_forward.1} parent=0 // pred_fallthru
    _
  // Predicated region
  $region14: #{lstm_forward.1} parent=0 // pred_check
    _
  $region15: #{lstm_forward.1} parent=0 // pred_check_branch
    %23 = sbr.rel (0) target = $region17
  $region16: #{lstm_forward.1} parent=0 // pred_region
    _
  $region17: #{lstm_forward.1} parent=0 // pred_fallthru
    _
  // Predicated region
  $region18: #{lstm_forward.1} parent=0 // pred_check
    _
  $region19: #{lstm_forward.1} parent=0 // pred_check_branch
    %25 = sbr.rel (0) target = $region21
  $region20: #{lstm_forward.1} parent=0 // pred_region
    _
  $region21: #{lstm_forward.1} parent=0 // pred_fallthru
    _
  // Predicated region
  $region22: #{lstm_forward.1} parent=0 // pred_check
    _
  $region23: #{lstm_forward.1} parent=0 // pred_check_branch
    %27 = sbr.rel (0) target = $region25
  $region24: #{lstm_forward.1} parent=0 // pred_region
    _
  $region25: #{lstm_forward.1} parent=0 // pred_fallthru
    _
  // Predicated region
  $region26: #{lstm_forward.1} parent=0 // pred_check
    _
  $region27: #{lstm_forward.1} parent=0 // pred_check_branch
    %29 = sbr.rel (0) target = $region29
  $region28: #{lstm_forward.1} parent=0 // pred_region
    _
  $region29: #{lstm_forward.1} parent=0 // pred_fallthru
    _
  // Predicated region
  $region30: #{lstm_forward.1} parent=0 // pred_check
    _
  $region31: #{lstm_forward.1} parent=0 // pred_check_branch
    %31 = sbr.rel (0) target = $region33
  $region32: #{lstm_forward.1} parent=0 // pred_region
    _
  $region33: #{lstm_forward.1} parent=0 // pred_fallthru
    _
  // Predicated region
  $region34: #{lstm_forward.1} parent=0 // pred_check
    _
  $region35: #{lstm_forward.1} parent=0 // pred_check_branch
    %33 = sbr.rel (0) target = $region37
  $region36: #{lstm_forward.1} parent=0 // pred_region
    _
  $region37: #{lstm_forward.1} parent=0 // pred_fallthru
    _
  %v34 = vld [vmem:[%s0] sm:$0xff]
  %v35 = vld [vmem:[%s0 + $0x8] sm:$0xff]
  %v36 = vld [vmem:[%s0 + $0x10] sm:$0xff]
  %v37 = vld [vmem:[%s0 + $0x18] sm:$0xff]
  %v38 = vld [vmem:[%s0 + $0x20] sm:$0xff]
  %v39 = vld [vmem:[%s0 + $0x28] sm:$0xff]
  %v40 = vld [vmem:[%s0 + $0x30] sm:$0xff]
  %v41 = vld [vmem:[%s0 + $0x38] sm:$0xff]
  %v42 = vld [vmem:[%s1] sm:$0x1]
  %44 = vset.pattern.permute.xlu0 0
  %45 = vperm.xlu0 %44, %v34
  %v46 = vpop.permute.xlu0 %45
  %49 = vset.pattern.permute.xlu0 0
  %50 = vperm.xlu0 %49, %v35
  %v51 = vpop.permute.xlu0 %50
  %54 = vset.pattern.permute.xlu0 0
  %55 = vperm.xlu0 %54, %v36
  %v56 = vpop.permute.xlu0 %55
  %59 = vset.pattern.permute.xlu0 0
  %60 = vperm.xlu0 %59, %v37
  %v61 = vpop.permute.xlu0 %60
  %64 = vset.pattern.permute.xlu0 0
  %65 = vperm.xlu0 %64, %v38
  %v66 = vpop.permute.xlu0 %65
  %69 = vset.pattern.permute.xlu0 0
  %70 = vperm.xlu0 %69, %v39
  %v71 = vpop.permute.xlu0 %70
  %74 = vset.pattern.permute.xlu0 0
  %75 = vperm.xlu0 %74, %v40
  %v76 = vpop.permute.xlu0 %75
  %79 = vset.pattern.permute.xlu0 0
  %80 = vperm.xlu0 %79, %v41
  %v81 = vpop.permute.xlu0 %80
  %v84 = vlaneseq
  %v85 = vshrl.u32 %v84, 7
  %v86 = vsub.s32 0, %v85
  %v87 = vrot.slane %v42, %v86
  %v89 = vmul.f32 %v46, %v87
  %v90 = vmul.f32 %v51, %v87
  %v91 = vmul.f32 %v56, %v87
  %v92 = vmul.f32 %v61, %v87
  %v93 = vmul.f32 %v66, %v87
  %v94 = vmul.f32 %v71, %v87
  %v95 = vmul.f32 %v76, %v87
  %v96 = vmul.f32 %v81, %v87
  %v97 = vld [vmem:[%s3] sm:$0x1]
  %v99 = vlaneseq
  %v100 = vshrl.u32 %v99, 7
  %v101 = vsub.s32 0, %v100
  %v102 = vrot.slane %v97, %v101
  %v104 = vadd.f32 %v89, %v102
  %v105 = vadd.f32 %v90, %v102
  %v106 = vadd.f32 %v91, %v102
  %v107 = vadd.f32 %v92, %v102
  %v108 = vadd.f32 %v93, %v102
  %v109 = vadd.f32 %v94, %v102
  %v110 = vadd.f32 %v95, %v102
  %v111 = vadd.f32 %v96, %v102
  %112 = vst [vmem:[#allocation2] sm:$0xff] %v104
  %113 = vst [vmem:[#allocation2 + $0x8] sm:$0xff] %v105
  %114 = vst [vmem:[#allocation2 + $0x10] sm:$0xff] %v106
  %115 = vst [vmem:[#allocation2 + $0x18] sm:$0xff] %v107
  %116 = vst [vmem:[#allocation2 + $0x20] sm:$0xff] %v108
  %117 = vst [vmem:[#allocation2 + $0x28] sm:$0xff] %v109
  %118 = vst [vmem:[#allocation2 + $0x30] sm:$0xff] %v110
  %119 = vst [vmem:[#allocation2 + $0x38] sm:$0xff] %v111
  %v120 = vld [vmem:[#allocation2] sm:$0xff]
  %v121 = vld [vmem:[%s2] sm:$0xff]
  %v122 = vld [vmem:[%s2 + $0x8] sm:$0xff]
  %v123 = vld [vmem:[%s2 + $0x10] sm:$0xff]
  %v124 = vld [vmem:[%s2 + $0x18] sm:$0xff]
  %vm125 = vcmask 261120
  %v127 = vsel %vm125, 0.0, 0
  %129 = vmatprep.subr.mxu0 0.0
  %130 = vmatpush1.msra.mxu0 0.0
  %131 = vmatprep.subr.mxu0 0.0
  %132 = vmatpush1.msra.mxu0 0.0
  %133 = vmatprep.subr.mxu0 0.0
  %134 = vmatpush1.msra.mxu0 0.0
  %135 = vmatprep.subr.mxu0 0.0
  %136 = vmatpush1.msra.mxu0 0.0
  %137 = vmatprep.subr.mxu0 0.0
  %138 = vmatpush1.msra.mxu0 0.0
  %139 = vmatprep.subr.mxu0 0.0
  %140 = vmatpush1.msra.mxu0 0.0
  %141 = vmatprep.subr.mxu0 0.0
  %142 = vmatpush1.msra.mxu0 0.0
  %143 = vmatprep.subr.mxu0 0.0
  %144 = vmatpush1.msra.mxu0 0.0
  %145 = vmatprep.subr.mxu0 0.0
  %146 = vmatpush1.msra.mxu0 0.0
  %147 = vmatprep.subr.mxu0 0.0
  %148 = vmatpush1.msra.mxu0 0.0
  %149 = vmatprep.subr.mxu0 0.0
  %150 = vmatpush1.msra.mxu0 0.0
  %151 = vmatprep.subr.mxu0 0.0
  %152 = vmatpush1.msra.mxu0 0.0
  %153 = vmatprep.subr.mxu0 0.0
  %154 = vmatpush1.msra.mxu0 %v124
  %155 = vmatprep.subr.mxu0 0.0
  %156 = vmatpush1.msra.mxu0 %v123
  %157 = vmatprep.subr.mxu0 0.0
  %158 = vmatpush1.msra.mxu0 %v122
  %159 = vmatprep.subr.mxu0 0.0
  %160 = vmatpush1.msra.mxu0 %v121
  %161 = vmatprep.subr.mxu0 0.0
  %162 = vmatpush2.msra.mxu0 0.0
  %163 = vmatprep.subr.mxu0 0.0
  %164 = vmatpush2.msra.mxu0 0.0
  %165 = vmatprep.subr.mxu0 0.0
  %166 = vmatpush2.msra.mxu0 0.0
  %167 = vmatprep.subr.mxu0 0.0
  %168 = vmatpush2.msra.mxu0 0.0
  %169 = vmatprep.subr.mxu0 0.0
  %170 = vmatpush2.msra.mxu0 0.0
  %171 = vmatprep.subr.mxu0 0.0
  %172 = vmatpush2.msra.mxu0 0.0
  %173 = vmatprep.subr.mxu0 0.0
  %174 = vmatpush2.msra.mxu0 0.0
  %175 = vmatprep.subr.mxu0 0.0
  %176 = vmatpush2.msra.mxu0 0.0
  %177 = vmatprep.subr.mxu0 0.0
  %178 = vmatpush2.msra.mxu0 0.0
  %179 = vmatprep.subr.mxu0 0.0
  %180 = vmatpush2.msra.mxu0 0.0
  %181 = vmatprep.subr.mxu0 0.0
  %182 = vmatpush2.msra.mxu0 0.0
  %183 = vmatprep.subr.mxu0 0.0
  %184 = vmatpush2.msra.mxu0 0.0
  %185 = vmatprep.subr.mxu0 0.0
  %186 = vmatpush2.msra.mxu0 0.0
  %187 = vmatprep.subr.mxu0 0.0
  %188 = vmatpush2.msra.mxu0 0.0
  %189 = vmatprep.subr.mxu0 0.0
  %190 = vmatpush2.msra.mxu0 0.0
  %191 = vmatprep.subr.mxu0 0.0
  %192 = vmatpush2.msra.mxu0 0.0
  %193 = vmatprep.mubr.f32.mxu0 0.0
  %194 = vmatmul.mubr.f32.gmra.mxu0 %v127
  %v195 = vpop.f32.mrf.mxu0
  %v196 = vadd.f32 0.0, %v195
  %v197 = vpop.f32.mrf.mxu0
  %198 = vdwg.mxu0
  %v199 = vadd.f32 %v120, %v196
  %v200 = vxor.u32 %v199, 2147483648
  %v201 = vmul.f32 %v200, 1.442695
  %v202 = vpow.pop %v201
  %v203 = vadd.f32 %v202, 1.0
  %v204 = vrcp.pop %v203
  %v205 = vmul.f32 1.0, %v204
  %v206 = vmul.f32 %v205, 2.0
  %v207 = vsub.f32 %v206, 1.0
  %v208 = vmul.f32 %v205, 0.0
  %210 = vrot.lane.b32.xlu0 %v207, 32
  %v211 = vpop.permute.xlu0 %210
  %v213 = vmul.f32 %v205, %v211
  %215 = vrot.lane.b32.xlu0 %v213, 32
  %v216 = vpop.permute.xlu0 %215
  %v218 = vadd.f32 %v208, %v216
  %v219 = vtanh.pop %v218
  %221 = vrot.lane.b32.xlu0 %v219, 32
  %v222 = vpop.permute.xlu0 %221
  %v224 = vmul.f32 %v205, %v222
  %226 = vrot.lane.b32.xlu0 %v224, 64
  %v227 = vpop.permute.xlu0 %226
  %229 = vst.msk [vmem:[#allocation3] sm:$0xff] %vm125, %v227
  %s230 = scalar_lea.vmem [#allocation2], 8
  %v231 = vld [vmem:[%s230] sm:$0xff]
  %v232 = vld [vmem:[%s2] sm:$0xff]
  %v233 = vld [vmem:[%s2 + $0x8] sm:$0xff]
  %v234 = vld [vmem:[%s2 + $0x10] sm:$0xff]
  %v235 = vld [vmem:[%s2 + $0x18] sm:$0xff]
  %v236 = vsel %vm125, %v227, 0
  %238 = vmatprep.subr.mxu0 0.0
  %239 = vmatpush1.msra.mxu0 0.0
  %240 = vmatprep.subr.mxu0 0.0
  %241 = vmatpush1.msra.mxu0 0.0
  %242 = vmatprep.subr.mxu0 0.0
  %243 = vmatpush1.msra.mxu0 0.0
  %244 = vmatprep.subr.mxu0 0.0
  %245 = vmatpush1.msra.mxu0 0.0
  %246 = vmatprep.subr.mxu0 0.0
  %247 = vmatpush1.msra.mxu0 0.0
  %248 = vmatprep.subr.mxu0 0.0
  %249 = vmatpush1.msra.mxu0 0.0
  %250 = vmatprep.subr.mxu0 0.0
  %251 = vmatpush1.msra.mxu0 0.0
  %252 = vmatprep.subr.mxu0 0.0
  %253 = vmatpush1.msra.mxu0 0.0
  %254 = vmatprep.subr.mxu0 0.0
  %255 = vmatpush1.msra.mxu0 0.0
  %256 = vmatprep.subr.mxu0 0.0
  %257 = vmatpush1.msra.mxu0 0.0
  %258 = vmatprep.subr.mxu0 0.0
  %259 = vmatpush1.msra.mxu0 0.0
  %260 = vmatprep.subr.mxu0 0.0
  %261 = vmatpush1.msra.mxu0 0.0
  %262 = vmatprep.subr.mxu0 0.0
  %263 = vmatpush1.msra.mxu0 %v235
  %264 = vmatprep.subr.mxu0 0.0
  %265 = vmatpush1.msra.mxu0 %v234
  %266 = vmatprep.subr.mxu0 0.0
  %267 = vmatpush1.msra.mxu0 %v233
  %268 = vmatprep.subr.mxu0 0.0
  %269 = vmatpush1.msra.mxu0 %v232
  %270 = vmatprep.subr.mxu0 0.0
  %271 = vmatpush2.msra.mxu0 0.0
  %272 = vmatprep.subr.mxu0 0.0
  %273 = vmatpush2.msra.mxu0 0.0
  %274 = vmatprep.subr.mxu0 0.0
  %275 = vmatpush2.msra.mxu0 0.0
  %276 = vmatprep.subr.mxu0 0.0
  %277 = vmatpush2.msra.mxu0 0.0
  %278 = vmatprep.subr.mxu0 0.0
  %279 = vmatpush2.msra.mxu0 0.0
  %280 = vmatprep.subr.mxu0 0.0
  %281 = vmatpush2.msra.mxu0 0.0
  %282 = vmatprep.subr.mxu0 0.0
  %283 = vmatpush2.msra.mxu0 0.0
  %284 = vmatprep.subr.mxu0 0.0
  %285 = vmatpush2.msra.mxu0 0.0
  %286 = vmatprep.subr.mxu0 0.0
  %287 = vmatpush2.msra.mxu0 0.0
  %288 = vmatprep.subr.mxu0 0.0
  %289 = vmatpush2.msra.mxu0 0.0
  %290 = vmatprep.subr.mxu0 0.0
  %291 = vmatpush2.msra.mxu0 0.0
  %292 = vmatprep.subr.mxu0 0.0
  %293 = vmatpush2.msra.mxu0 0.0
  %294 = vmatprep.subr.mxu0 0.0
  %295 = vmatpush2.msra.mxu0 0.0
  %296 = vmatprep.subr.mxu0 0.0
  %297 = vmatpush2.msra.mxu0 0.0
  %298 = vmatprep.subr.mxu0 0.0
  %299 = vmatpush2.msra.mxu0 0.0
  %300 = vmatprep.subr.mxu0 0.0
  %301 = vmatpush2.msra.mxu0 0.0
  %302 = vmatprep.mubr.f32.mxu0 0.0
  %303 = vmatmul.mubr.f32.gmra.mxu0 %v236
  %v304 = vpop.f32.mrf.mxu0
  %v305 = vadd.f32 0.0, %v304
  %v306 = vpop.f32.mrf.mxu0
  %307 = vdwg.mxu0
  %v308 = vadd.f32 %v231, %v305
  %v309 = vxor.u32 %v308, 2147483648
  %v310 = vmul.f32 %v309, 1.442695
  %v311 = vpow.pop %v310
  %v312 = vadd.f32 %v311, 1.0
  %v313 = vrcp.pop %v312
  %v314 = vmul.f32 1.0, %v313
  %v315 = vmul.f32 %v314, 2.0
  %v316 = vsub.f32 %v315, 1.0
  %v317 = vmul.f32 %v314, %v218
  %319 = vrot.lane.b32.xlu0 %v316, 32
  %v320 = vpop.permute.xlu0 %319
  %v322 = vmul.f32 %v314, %v320
  %324 = vrot.lane.b32.xlu0 %v322, 32
  %v325 = vpop.permute.xlu0 %324
  %v327 = vadd.f32 %v317, %v325
  %v328 = vtanh.pop %v327
  %330 = vrot.lane.b32.xlu0 %v328, 32
  %v331 = vpop.permute.xlu0 %330
  %v333 = vmul.f32 %v314, %v331
  %335 = vrot.lane.b32.xlu0 %v333, 64
  %v336 = vpop.permute.xlu0 %335
  %s338 = scalar_lea.vmem [#allocation3], 8
  %339 = vst.msk [vmem:[%s338] sm:$0xff] %vm125, %v336
  %s340 = scalar_lea.vmem [#allocation2], 16
  %v341 = vld [vmem:[%s340] sm:$0xff]
  %v342 = vld [vmem:[%s2] sm:$0xff]
  %v343 = vld [vmem:[%s2 + $0x8] sm:$0xff]
  %v344 = vld [vmem:[%s2 + $0x10] sm:$0xff]
  %v345 = vld [vmem:[%s2 + $0x18] sm:$0xff]
  %v346 = vsel %vm125, %v336, 0
  %348 = vmatprep.subr.mxu0 0.0
  %349 = vmatpush1.msra.mxu0 0.0
  %350 = vmatprep.subr.mxu0 0.0
  %351 = vmatpush1.msra.mxu0 0.0
  %352 = vmatprep.subr.mxu0 0.0
  %353 = vmatpush1.msra.mxu0 0.0
  %354 = vmatprep.subr.mxu0 0.0
  %355 = vmatpush1.msra.mxu0 0.0
  %356 = vmatprep.subr.mxu0 0.0
  %357 = vmatpush1.msra.mxu0 0.0
  %358 = vmatprep.subr.mxu0 0.0
  %359 = vmatpush1.msra.mxu0 0.0
  %360 = vmatprep.subr.mxu0 0.0
  %361 = vmatpush1.msra.mxu0 0.0
  %362 = vmatprep.subr.mxu0 0.0
  %363 = vmatpush1.msra.mxu0 0.0
  %364 = vmatprep.subr.mxu0 0.0
  %365 = vmatpush1.msra.mxu0 0.0
  %366 = vmatprep.subr.mxu0 0.0
  %367 = vmatpush1.msra.mxu0 0.0
  %368 = vmatprep.subr.mxu0 0.0
  %369 = vmatpush1.msra.mxu0 0.0
  %370 = vmatprep.subr.mxu0 0.0
  %371 = vmatpush1.msra.mxu0 0.0
  %372 = vmatprep.subr.mxu0 0.0
  %373 = vmatpush1.msra.mxu0 %v345
  %374 = vmatprep.subr.mxu0 0.0
  %375 = vmatpush1.msra.mxu0 %v344
  %376 = vmatprep.subr.mxu0 0.0
  %377 = vmatpush1.msra.mxu0 %v343
  %378 = vmatprep.subr.mxu0 0.0
  %379 = vmatpush1.msra.mxu0 %v342
  %380 = vmatprep.subr.mxu0 0.0
  %381 = vmatpush2.msra.mxu0 0.0
  %382 = vmatprep.subr.mxu0 0.0
  %383 = vmatpush2.msra.mxu0 0.0
  %384 = vmatprep.subr.mxu0 0.0
  %385 = vmatpush2.msra.mxu0 0.0
  %386 = vmatprep.subr.mxu0 0.0
  %387 = vmatpush2.msra.mxu0 0.0
  %388 = vmatprep.subr.mxu0 0.0
  %389 = vmatpush2.msra.mxu0 0.0
  %390 = vmatprep.subr.mxu0 0.0
  %391 = vmatpush2.msra.mxu0 0.0
  %392 = vmatprep.subr.mxu0 0.0
  %393 = vmatpush2.msra.mxu0 0.0
  %394 = vmatprep.subr.mxu0 0.0
  %395 = vmatpush2.msra.mxu0 0.0
  %396 = vmatprep.subr.mxu0 0.0
  %397 = vmatpush2.msra.mxu0 0.0
  %398 = vmatprep.subr.mxu0 0.0
  %399 = vmatpush2.msra.mxu0 0.0
  %400 = vmatprep.subr.mxu0 0.0
  %401 = vmatpush2.msra.mxu0 0.0
  %402 = vmatprep.subr.mxu0 0.0
  %403 = vmatpush2.msra.mxu0 0.0
  %404 = vmatprep.subr.mxu0 0.0
  %405 = vmatpush2.msra.mxu0 0.0
  %406 = vmatprep.subr.mxu0 0.0
  %407 = vmatpush2.msra.mxu0 0.0
  %408 = vmatprep.subr.mxu0 0.0
  %409 = vmatpush2.msra.mxu0 0.0
  %410 = vmatprep.subr.mxu0 0.0
  %411 = vmatpush2.msra.mxu0 0.0
  %412 = vmatprep.mubr.f32.mxu0 0.0
  %413 = vmatmul.mubr.f32.gmra.mxu0 %v346
  %v414 = vpop.f32.mrf.mxu0
  %v415 = vadd.f32 0.0, %v414
  %v416 = vpop.f32.mrf.mxu0
  %417 = vdwg.mxu0
  %v418 = vadd.f32 %v341, %v415
  %v419 = vxor.u32 %v418, 2147483648
  %v420 = vmul.f32 %v419, 1.442695
  %v421 = vpow.pop %v420
  %v422 = vadd.f32 %v421, 1.0
  %v423 = vrcp.pop %v422
  %v424 = vmul.f32 1.0, %v423
  %v425 = vmul.f32 %v424, 2.0
  %v426 = vsub.f32 %v425, 1.0
  %v427 = vmul.f32 %v424, %v327
  %429 = vrot.lane.b32.xlu0 %v426, 32
  %v430 = vpop.permute.xlu0 %429
  %v432 = vmul.f32 %v424, %v430
  %434 = vrot.lane.b32.xlu0 %v432, 32
  %v435 = vpop.permute.xlu0 %434
  %v437 = vadd.f32 %v427, %v435
  %v438 = vtanh.pop %v437
  %440 = vrot.lane.b32.xlu0 %v438, 32
  %v441 = vpop.permute.xlu0 %440
  %v443 = vmul.f32 %v424, %v441
  %445 = vrot.lane.b32.xlu0 %v443, 64
  %v446 = vpop.permute.xlu0 %445
  %s448 = scalar_lea.vmem [#allocation3], 16
  %449 = vst.msk [vmem:[%s448] sm:$0xff] %vm125, %v446
  %s450 = scalar_lea.vmem [#allocation2], 24
  %v451 = vld [vmem:[%s450] sm:$0xff]
  %v452 = vld [vmem:[%s2] sm:$0xff]
  %v453 = vld [vmem:[%s2 + $0x8] sm:$0xff]
  %v454 = vld [vmem:[%s2 + $0x10] sm:$0xff]
  %v455 = vld [vmem:[%s2 + $0x18] sm:$0xff]
  %v456 = vsel %vm125, %v446, 0
  %458 = vmatprep.subr.mxu0 0.0
  %459 = vmatpush1.msra.mxu0 0.0
  %460 = vmatprep.subr.mxu0 0.0
  %461 = vmatpush1.msra.mxu0 0.0
  %462 = vmatprep.subr.mxu0 0.0
  %463 = vmatpush1.msra.mxu0 0.0
  %464 = vmatprep.subr.mxu0 0.0
  %465 = vmatpush1.msra.mxu0 0.0
  %466 = vmatprep.subr.mxu0 0.0
  %467 = vmatpush1.msra.mxu0 0.0
  %468 = vmatprep.subr.mxu0 0.0
  %469 = vmatpush1.msra.mxu0 0.0
  %470 = vmatprep.subr.mxu0 0.0
  %471 = vmatpush1.msra.mxu0 0.0
  %472 = vmatprep.subr.mxu0 0.0
  %473 = vmatpush1.msra.mxu0 0.0
  %474 = vmatprep.subr.mxu0 0.0
  %475 = vmatpush1.msra.mxu0 0.0
  %476 = vmatprep.subr.mxu0 0.0
  %477 = vmatpush1.msra.mxu0 0.0
  %478 = vmatprep.subr.mxu0 0.0
  %479 = vmatpush1.msra.mxu0 0.0
  %480 = vmatprep.subr.mxu0 0.0
  %481 = vmatpush1.msra.mxu0 0.0
  %482 = vmatprep.subr.mxu0 0.0
  %483 = vmatpush1.msra.mxu0 %v455
  %484 = vmatprep.subr.mxu0 0.0
  %485 = vmatpush1.msra.mxu0 %v454
  %486 = vmatprep.subr.mxu0 0.0
  %487 = vmatpush1.msra.mxu0 %v453
  %488 = vmatprep.subr.mxu0 0.0
  %489 = vmatpush1.msra.mxu0 %v452
  %490 = vmatprep.subr.mxu0 0.0
  %491 = vmatpush2.msra.mxu0 0.0
  %492 = vmatprep.subr.mxu0 0.0
  %493 = vmatpush2.msra.mxu0 0.0
  %494 = vmatprep.subr.mxu0 0.0
  %495 = vmatpush2.msra.mxu0 0.0
  %496 = vmatprep.subr.mxu0 0.0
  %497 = vmatpush2.msra.mxu0 0.0
  %498 = vmatprep.subr.mxu0 0.0
  %499 = vmatpush2.msra.mxu0 0.0
  %500 = vmatprep.subr.mxu0 0.0
  %501 = vmatpush2.msra.mxu0 0.0
  %502 = vmatprep.subr.mxu0 0.0
  %503 = vmatpush2.msra.mxu0 0.0
  %504 = vmatprep.subr.mxu0 0.0
  %505 = vmatpush2.msra.mxu0 0.0
  %506 = vmatprep.subr.mxu0 0.0
  %507 = vmatpush2.msra.mxu0 0.0
  %508 = vmatprep.subr.mxu0 0.0
  %509 = vmatpush2.msra.mxu0 0.0
  %510 = vmatprep.subr.mxu0 0.0
  %511 = vmatpush2.msra.mxu0 0.0
  %512 = vmatprep.subr.mxu0 0.0
  %513 = vmatpush2.msra.mxu0 0.0
  %514 = vmatprep.subr.mxu0 0.0
  %515 = vmatpush2.msra.mxu0 0.0
  %516 = vmatprep.subr.mxu0 0.0
  %517 = vmatpush2.msra.mxu0 0.0
  %518 = vmatprep.subr.mxu0 0.0
  %519 = vmatpush2.msra.mxu0 0.0
  %520 = vmatprep.subr.mxu0 0.0
  %521 = vmatpush2.msra.mxu0 0.0
  %522 = vmatprep.mubr.f32.mxu0 0.0
  %523 = vmatmul.mubr.f32.gmra.mxu0 %v456
  %v524 = vpop.f32.mrf.mxu0
  %v525 = vadd.f32 0.0, %v524
  %v526 = vpop.f32.mrf.mxu0
  %527 = vdwg.mxu0
  %v528 = vadd.f32 %v451, %v525
  %v529 = vxor.u32 %v528, 2147483648
  %v530 = vmul.f32 %v529, 1.442695
  %v531 = vpow.pop %v530
  %v532 = vadd.f32 %v531, 1.0
  %v533 = vrcp.pop %v532
  %v534 = vmul.f32 1.0, %v533
  %v535 = vmul.f32 %v534, 2.0
  %v536 = vsub.f32 %v535, 1.0
  %v537 = vmul.f32 %v534, %v437
  %539 = vrot.lane.b32.xlu0 %v536, 32
  %v540 = vpop.permute.xlu0 %539
  %v542 = vmul.f32 %v534, %v540
  %544 = vrot.lane.b32.xlu0 %v542, 32
  %v545 = vpop.permute.xlu0 %544
  %v547 = vadd.f32 %v537, %v545
  %v548 = vtanh.pop %v547
  %550 = vrot.lane.b32.xlu0 %v548, 32
  %v551 = vpop.permute.xlu0 %550
  %v553 = vmul.f32 %v534, %v551
  %555 = vrot.lane.b32.xlu0 %v553, 64
  %v556 = vpop.permute.xlu0 %555
  %s558 = scalar_lea.vmem [#allocation3], 24
  %559 = vst.msk [vmem:[%s558] sm:$0xff] %vm125, %v556
  %s560 = scalar_lea.vmem [#allocation2], 32
  %v561 = vld [vmem:[%s560] sm:$0xff]
  %v562 = vld [vmem:[%s2] sm:$0xff]
  %v563 = vld [vmem:[%s2 + $0x8] sm:$0xff]
  %v564 = vld [vmem:[%s2 + $0x10] sm:$0xff]
  %v565 = vld [vmem:[%s2 + $0x18] sm:$0xff]
  %v566 = vsel %vm125, %v556, 0
  %568 = vmatprep.subr.mxu0 0.0
  %569 = vmatpush1.msra.mxu0 0.0
  %570 = vmatprep.subr.mxu0 0.0
  %571 = vmatpush1.msra.mxu0 0.0
  %572 = vmatprep.subr.mxu0 0.0
  %573 = vmatpush1.msra.mxu0 0.0
  %574 = vmatprep.subr.mxu0 0.0
  %575 = vmatpush1.msra.mxu0 0.0
  %576 = vmatprep.subr.mxu0 0.0
  %577 = vmatpush1.msra.mxu0 0.0
  %578 = vmatprep.subr.mxu0 0.0
  %579 = vmatpush1.msra.mxu0 0.0
  %580 = vmatprep.subr.mxu0 0.0
  %581 = vmatpush1.msra.mxu0 0.0
  %582 = vmatprep.subr.mxu0 0.0
  %583 = vmatpush1.msra.mxu0 0.0
  %584 = vmatprep.subr.mxu0 0.0
  %585 = vmatpush1.msra.mxu0 0.0
  %586 = vmatprep.subr.mxu0 0.0
  %587 = vmatpush1.msra.mxu0 0.0
  %588 = vmatprep.subr.mxu0 0.0
  %589 = vmatpush1.msra.mxu0 0.0
  %590 = vmatprep.subr.mxu0 0.0
  %591 = vmatpush1.msra.mxu0 0.0
  %592 = vmatprep.subr.mxu0 0.0
  %593 = vmatpush1.msra.mxu0 %v565
  %594 = vmatprep.subr.mxu0 0.0
  %595 = vmatpush1.msra.mxu0 %v564
  %596 = vmatprep.subr.mxu0 0.0
  %597 = vmatpush1.msra.mxu0 %v563
  %598 = vmatprep.subr.mxu0 0.0
  %599 = vmatpush1.msra.mxu0 %v562
  %600 = vmatprep.subr.mxu0 0.0
  %601 = vmatpush2.msra.mxu0 0.0
  %602 = vmatprep.subr.mxu0 0.0
  %603 = vmatpush2.msra.mxu0 0.0
  %604 = vmatprep.subr.mxu0 0.0
  %605 = vmatpush2.msra.mxu0 0.0
  %606 = vmatprep.subr.mxu0 0.0
  %607 = vmatpush2.msra.mxu0 0.0
  %608 = vmatprep.subr.mxu0 0.0
  %609 = vmatpush2.msra.mxu0 0.0
  %610 = vmatprep.subr.mxu0 0.0
  %611 = vmatpush2.msra.mxu0 0.0
  %612 = vmatprep.subr.mxu0 0.0
  %613 = vmatpush2.msra.mxu0 0.0
  %614 = vmatprep.subr.mxu0 0.0
  %615 = vmatpush2.msra.mxu0 0.0
  %616 = vmatprep.subr.mxu0 0.0
  %617 = vmatpush2.msra.mxu0 0.0
  %618 = vmatprep.subr.mxu0 0.0
  %619 = vmatpush2.msra.mxu0 0.0
  %620 = vmatprep.subr.mxu0 0.0
  %621 = vmatpush2.msra.mxu0 0.0
  %622 = vmatprep.subr.mxu0 0.0
  %623 = vmatpush2.msra.mxu0 0.0
  %624 = vmatprep.subr.mxu0 0.0
  %625 = vmatpush2.msra.mxu0 0.0
  %626 = vmatprep.subr.mxu0 0.0
  %627 = vmatpush2.msra.mxu0 0.0
  %628 = vmatprep.subr.mxu0 0.0
  %629 = vmatpush2.msra.mxu0 0.0
  %630 = vmatprep.subr.mxu0 0.0
  %631 = vmatpush2.msra.mxu0 0.0
  %632 = vmatprep.mubr.f32.mxu0 0.0
  %633 = vmatmul.mubr.f32.gmra.mxu0 %v566
  %v634 = vpop.f32.mrf.mxu0
  %v635 = vadd.f32 0.0, %v634
  %v636 = vpop.f32.mrf.mxu0
  %637 = vdwg.mxu0
  %v638 = vadd.f32 %v561, %v635
  %v639 = vxor.u32 %v638, 2147483648
  %v640 = vmul.f32 %v639, 1.442695
  %v641 = vpow.pop %v640
  %v642 = vadd.f32 %v641, 1.0
  %v643 = vrcp.pop %v642
  %v644 = vmul.f32 1.0, %v643
  %v645 = vmul.f32 %v644, 2.0
  %v646 = vsub.f32 %v645, 1.0
  %v647 = vmul.f32 %v644, %v547
  %649 = vrot.lane.b32.xlu0 %v646, 32
  %v650 = vpop.permute.xlu0 %649
  %v652 = vmul.f32 %v644, %v650
  %654 = vrot.lane.b32.xlu0 %v652, 32
  %v655 = vpop.permute.xlu0 %654
  %v657 = vadd.f32 %v647, %v655
  %v658 = vtanh.pop %v657
  %660 = vrot.lane.b32.xlu0 %v658, 32
  %v661 = vpop.permute.xlu0 %660
  %v663 = vmul.f32 %v644, %v661
  %665 = vrot.lane.b32.xlu0 %v663, 64
  %v666 = vpop.permute.xlu0 %665
  %s668 = scalar_lea.vmem [#allocation3], 32
  %669 = vst.msk [vmem:[%s668] sm:$0xff] %vm125, %v666
  %s670 = scalar_lea.vmem [#allocation2], 40
  %v671 = vld [vmem:[%s670] sm:$0xff]
  %v672 = vld [vmem:[%s2] sm:$0xff]
  %v673 = vld [vmem:[%s2 + $0x8] sm:$0xff]
  %v674 = vld [vmem:[%s2 + $0x10] sm:$0xff]
  %v675 = vld [vmem:[%s2 + $0x18] sm:$0xff]
  %v676 = vsel %vm125, %v666, 0
  %678 = vmatprep.subr.mxu0 0.0
  %679 = vmatpush1.msra.mxu0 0.0
  %680 = vmatprep.subr.mxu0 0.0
  %681 = vmatpush1.msra.mxu0 0.0
  %682 = vmatprep.subr.mxu0 0.0
  %683 = vmatpush1.msra.mxu0 0.0
  %684 = vmatprep.subr.mxu0 0.0
  %685 = vmatpush1.msra.mxu0 0.0
  %686 = vmatprep.subr.mxu0 0.0
  %687 = vmatpush1.msra.mxu0 0.0
  %688 = vmatprep.subr.mxu0 0.0
  %689 = vmatpush1.msra.mxu0 0.0
  %690 = vmatprep.subr.mxu0 0.0
  %691 = vmatpush1.msra.mxu0 0.0
  %692 = vmatprep.subr.mxu0 0.0
  %693 = vmatpush1.msra.mxu0 0.0
  %694 = vmatprep.subr.mxu0 0.0
  %695 = vmatpush1.msra.mxu0 0.0
  %696 = vmatprep.subr.mxu0 0.0
  %697 = vmatpush1.msra.mxu0 0.0
  %698 = vmatprep.subr.mxu0 0.0
  %699 = vmatpush1.msra.mxu0 0.0
  %700 = vmatprep.subr.mxu0 0.0
  %701 = vmatpush1.msra.mxu0 0.0
  %702 = vmatprep.subr.mxu0 0.0
  %703 = vmatpush1.msra.mxu0 %v675
  %704 = vmatprep.subr.mxu0 0.0
  %705 = vmatpush1.msra.mxu0 %v674
  %706 = vmatprep.subr.mxu0 0.0
  %707 = vmatpush1.msra.mxu0 %v673
  %708 = vmatprep.subr.mxu0 0.0
  %709 = vmatpush1.msra.mxu0 %v672
  %710 = vmatprep.subr.mxu0 0.0
  %711 = vmatpush2.msra.mxu0 0.0
  %712 = vmatprep.subr.mxu0 0.0
  %713 = vmatpush2.msra.mxu0 0.0
  %714 = vmatprep.subr.mxu0 0.0
  %715 = vmatpush2.msra.mxu0 0.0
  %716 = vmatprep.subr.mxu0 0.0
  %717 = vmatpush2.msra.mxu0 0.0
  %718 = vmatprep.subr.mxu0 0.0
  %719 = vmatpush2.msra.mxu0 0.0
  %720 = vmatprep.subr.mxu0 0.0
  %721 = vmatpush2.msra.mxu0 0.0
  %722 = vmatprep.subr.mxu0 0.0
  %723 = vmatpush2.msra.mxu0 0.0
  %724 = vmatprep.subr.mxu0 0.0
  %725 = vmatpush2.msra.mxu0 0.0
  %726 = vmatprep.subr.mxu0 0.0
  %727 = vmatpush2.msra.mxu0 0.0
  %728 = vmatprep.subr.mxu0 0.0
  %729 = vmatpush2.msra.mxu0 0.0
  %730 = vmatprep.subr.mxu0 0.0
  %731 = vmatpush2.msra.mxu0 0.0
  %732 = vmatprep.subr.mxu0 0.0
  %733 = vmatpush2.msra.mxu0 0.0
  %734 = vmatprep.subr.mxu0 0.0
  %735 = vmatpush2.msra.mxu0 0.0
  %736 = vmatprep.subr.mxu0 0.0
  %737 = vmatpush2.msra.mxu0 0.0
  %738 = vmatprep.subr.mxu0 0.0
  %739 = vmatpush2.msra.mxu0 0.0
  %740 = vmatprep.subr.mxu0 0.0
  %741 = vmatpush2.msra.mxu0 0.0
  %742 = vmatprep.mubr.f32.mxu0 0.0
  %743 = vmatmul.mubr.f32.gmra.mxu0 %v676
  %v744 = vpop.f32.mrf.mxu0
  %v745 = vadd.f32 0.0, %v744
  %v746 = vpop.f32.mrf.mxu0
  %747 = vdwg.mxu0
  %v748 = vadd.f32 %v671, %v745
  %v749 = vxor.u32 %v748, 2147483648
  %v750 = vmul.f32 %v749, 1.442695
  %v751 = vpow.pop %v750
  %v752 = vadd.f32 %v751, 1.0
  %v753 = vrcp.pop %v752
  %v754 = vmul.f32 1.0, %v753
  %v755 = vmul.f32 %v754, 2.0
  %v756 = vsub.f32 %v755, 1.0
  %v757 = vmul.f32 %v754, %v657
  %759 = vrot.lane.b32.xlu0 %v756, 32
  %v760 = vpop.permute.xlu0 %759
  %v762 = vmul.f32 %v754, %v760
  %764 = vrot.lane.b32.xlu0 %v762, 32
  %v765 = vpop.permute.xlu0 %764
  %v767 = vadd.f32 %v757, %v765
  %v768 = vtanh.pop %v767
  %770 = vrot.lane.b32.xlu0 %v768, 32
  %v771 = vpop.permute.xlu0 %770
  %v773 = vmul.f32 %v754, %v771
  %775 = vrot.lane.b32.xlu0 %v773, 64
  %v776 = vpop.permute.xlu0 %775
  %s778 = scalar_lea.vmem [#allocation3], 40
  %779 = vst.msk [vmem:[%s778] sm:$0xff] %vm125, %v776
  %s780 = scalar_lea.vmem [#allocation2], 48
  %v781 = vld [vmem:[%s780] sm:$0xff]
  %v782 = vld [vmem:[%s2] sm:$0xff]
  %v783 = vld [vmem:[%s2 + $0x8] sm:$0xff]
  %v784 = vld [vmem:[%s2 + $0x10] sm:$0xff]
  %v785 = vld [vmem:[%s2 + $0x18] sm:$0xff]
  %v786 = vsel %vm125, %v776, 0
  %788 = vmatprep.subr.mxu0 0.0
  %789 = vmatpush1.msra.mxu0 0.0
  %790 = vmatprep.subr.mxu0 0.0
  %791 = vmatpush1.msra.mxu0 0.0
  %792 = vmatprep.subr.mxu0 0.0
  %793 = vmatpush1.msra.mxu0 0.0
  %794 = vmatprep.subr.mxu0 0.0
  %795 = vmatpush1.msra.mxu0 0.0
  %796 = vmatprep.subr.mxu0 0.0
  %797 = vmatpush1.msra.mxu0 0.0
  %798 = vmatprep.subr.mxu0 0.0
  %799 = vmatpush1.msra.mxu0 0.0
  %800 = vmatprep.subr.mxu0 0.0
  %801 = vmatpush1.msra.mxu0 0.0
  %802 = vmatprep.subr.mxu0 0.0
  %803 = vmatpush1.msra.mxu0 0.0
  %804 = vmatprep.subr.mxu0 0.0
  %805 = vmatpush1.msra.mxu0 0.0
  %806 = vmatprep.subr.mxu0 0.0
  %807 = vmatpush1.msra.mxu0 0.0
  %808 = vmatprep.subr.mxu0 0.0
  %809 = vmatpush1.msra.mxu0 0.0
  %810 = vmatprep.subr.mxu0 0.0
  %811 = vmatpush1.msra.mxu0 0.0
  %812 = vmatprep.subr.mxu0 0.0
  %813 = vmatpush1.msra.mxu0 %v785
  %814 = vmatprep.subr.mxu0 0.0
  %815 = vmatpush1.msra.mxu0 %v784
  %816 = vmatprep.subr.mxu0 0.0
  %817 = vmatpush1.msra.mxu0 %v783
  %818 = vmatprep.subr.mxu0 0.0
  %819 = vmatpush1.msra.mxu0 %v782
  %820 = vmatprep.subr.mxu0 0.0
  %821 = vmatpush2.msra.mxu0 0.0
  %822 = vmatprep.subr.mxu0 0.0
  %823 = vmatpush2.msra.mxu0 0.0
  %824 = vmatprep.subr.mxu0 0.0
  %825 = vmatpush2.msra.mxu0 0.0
  %826 = vmatprep.subr.mxu0 0.0
  %827 = vmatpush2.msra.mxu0 0.0
  %828 = vmatprep.subr.mxu0 0.0
  %829 = vmatpush2.msra.mxu0 0.0
  %830 = vmatprep.subr.mxu0 0.0
  %831 = vmatpush2.msra.mxu0 0.0
  %832 = vmatprep.subr.mxu0 0.0
  %833 = vmatpush2.msra.mxu0 0.0
  %834 = vmatprep.subr.mxu0 0.0
  %835 = vmatpush2.msra.mxu0 0.0
  %836 = vmatprep.subr.mxu0 0.0
  %837 = vmatpush2.msra.mxu0 0.0
  %838 = vmatprep.subr.mxu0 0.0
  %839 = vmatpush2.msra.mxu0 0.0
  %840 = vmatprep.subr.mxu0 0.0
  %841 = vmatpush2.msra.mxu0 0.0
  %842 = vmatprep.subr.mxu0 0.0
  %843 = vmatpush2.msra.mxu0 0.0
  %844 = vmatprep.subr.mxu0 0.0
  %845 = vmatpush2.msra.mxu0 0.0
  %846 = vmatprep.subr.mxu0 0.0
  %847 = vmatpush2.msra.mxu0 0.0
  %848 = vmatprep.subr.mxu0 0.0
  %849 = vmatpush2.msra.mxu0 0.0
  %850 = vmatprep.subr.mxu0 0.0
  %851 = vmatpush2.msra.mxu0 0.0
  %852 = vmatprep.mubr.f32.mxu0 0.0
  %853 = vmatmul.mubr.f32.gmra.mxu0 %v786
  %v854 = vpop.f32.mrf.mxu0
  %v855 = vadd.f32 0.0, %v854
  %v856 = vpop.f32.mrf.mxu0
  %857 = vdwg.mxu0
  %v858 = vadd.f32 %v781, %v855
  %v859 = vxor.u32 %v858, 2147483648
  %v860 = vmul.f32 %v859, 1.442695
  %v861 = vpow.pop %v860
  %v862 = vadd.f32 %v861, 1.0
  %v863 = vrcp.pop %v862
  %v864 = vmul.f32 1.0, %v863
  %v865 = vmul.f32 %v864, 2.0
  %v866 = vsub.f32 %v865, 1.0
  %v867 = vmul.f32 %v864, %v767
  %869 = vrot.lane.b32.xlu0 %v866, 32
  %v870 = vpop.permute.xlu0 %869
  %v872 = vmul.f32 %v864, %v870
  %874 = vrot.lane.b32.xlu0 %v872, 32
  %v875 = vpop.permute.xlu0 %874
  %v877 = vadd.f32 %v867, %v875
  %v878 = vtanh.pop %v877
  %880 = vrot.lane.b32.xlu0 %v878, 32
  %v881 = vpop.permute.xlu0 %880
  %v883 = vmul.f32 %v864, %v881
  %885 = vrot.lane.b32.xlu0 %v883, 64
  %v886 = vpop.permute.xlu0 %885
  %s888 = scalar_lea.vmem [#allocation3], 48
  %889 = vst.msk [vmem:[%s888] sm:$0xff] %vm125, %v886
  %s890 = scalar_lea.vmem [#allocation2], 56
  %v891 = vld [vmem:[%s890] sm:$0xff]
  %v892 = vld [vmem:[%s2] sm:$0xff]
  %v893 = vld [vmem:[%s2 + $0x8] sm:$0xff]
  %v894 = vld [vmem:[%s2 + $0x10] sm:$0xff]
  %v895 = vld [vmem:[%s2 + $0x18] sm:$0xff]
  %v896 = vsel %vm125, %v886, 0
  %898 = vmatprep.subr.mxu0 0.0
  %899 = vmatpush1.msra.mxu0 0.0
  %900 = vmatprep.subr.mxu0 0.0
  %901 = vmatpush1.msra.mxu0 0.0
  %902 = vmatprep.subr.mxu0 0.0
  %903 = vmatpush1.msra.mxu0 0.0
  %904 = vmatprep.subr.mxu0 0.0
  %905 = vmatpush1.msra.mxu0 0.0
  %906 = vmatprep.subr.mxu0 0.0
  %907 = vmatpush1.msra.mxu0 0.0
  %908 = vmatprep.subr.mxu0 0.0
  %909 = vmatpush1.msra.mxu0 0.0
  %910 = vmatprep.subr.mxu0 0.0
  %911 = vmatpush1.msra.mxu0 0.0
  %912 = vmatprep.subr.mxu0 0.0
  %913 = vmatpush1.msra.mxu0 0.0
  %914 = vmatprep.subr.mxu0 0.0
  %915 = vmatpush1.msra.mxu0 0.0
  %916 = vmatprep.subr.mxu0 0.0
  %917 = vmatpush1.msra.mxu0 0.0
  %918 = vmatprep.subr.mxu0 0.0
  %919 = vmatpush1.msra.mxu0 0.0
  %920 = vmatprep.subr.mxu0 0.0
  %921 = vmatpush1.msra.mxu0 0.0
  %922 = vmatprep.subr.mxu0 0.0
  %923 = vmatpush1.msra.mxu0 %v895
  %924 = vmatprep.subr.mxu0 0.0
  %925 = vmatpush1.msra.mxu0 %v894
  %926 = vmatprep.subr.mxu0 0.0
  %927 = vmatpush1.msra.mxu0 %v893
  %928 = vmatprep.subr.mxu0 0.0
  %929 = vmatpush1.msra.mxu0 %v892
  %930 = vmatprep.subr.mxu0 0.0
  %931 = vmatpush2.msra.mxu0 0.0
  %932 = vmatprep.subr.mxu0 0.0
  %933 = vmatpush2.msra.mxu0 0.0
  %934 = vmatprep.subr.mxu0 0.0
  %935 = vmatpush2.msra.mxu0 0.0
  %936 = vmatprep.subr.mxu0 0.0
  %937 = vmatpush2.msra.mxu0 0.0
  %938 = vmatprep.subr.mxu0 0.0
  %939 = vmatpush2.msra.mxu0 0.0
  %940 = vmatprep.subr.mxu0 0.0
  %941 = vmatpush2.msra.mxu0 0.0
  %942 = vmatprep.subr.mxu0 0.0
  %943 = vmatpush2.msra.mxu0 0.0
  %944 = vmatprep.subr.mxu0 0.0
  %945 = vmatpush2.msra.mxu0 0.0
  %946 = vmatprep.subr.mxu0 0.0
  %947 = vmatpush2.msra.mxu0 0.0
  %948 = vmatprep.subr.mxu0 0.0
  %949 = vmatpush2.msra.mxu0 0.0
  %950 = vmatprep.subr.mxu0 0.0
  %951 = vmatpush2.msra.mxu0 0.0
  %952 = vmatprep.subr.mxu0 0.0
  %953 = vmatpush2.msra.mxu0 0.0
  %954 = vmatprep.subr.mxu0 0.0
  %955 = vmatpush2.msra.mxu0 0.0
  %956 = vmatprep.subr.mxu0 0.0
  %957 = vmatpush2.msra.mxu0 0.0
  %958 = vmatprep.subr.mxu0 0.0
  %959 = vmatpush2.msra.mxu0 0.0
  %960 = vmatprep.subr.mxu0 0.0
  %961 = vmatpush2.msra.mxu0 0.0
  %962 = vmatprep.mubr.f32.mxu0 0.0
  %963 = vmatmul.mubr.f32.gmra.mxu0 %v896
  %v964 = vpop.f32.mrf.mxu0
  %v965 = vadd.f32 0.0, %v964
  %v966 = vpop.f32.mrf.mxu0
  %967 = vdwg.mxu0
  %v968 = vadd.f32 %v891, %v965
  %v969 = vxor.u32 %v968, 2147483648
  %v970 = vmul.f32 %v969, 1.442695
  %v971 = vpow.pop %v970
  %v972 = vadd.f32 %v971, 1.0
  %v973 = vrcp.pop %v972
  %v974 = vmul.f32 1.0, %v973
  %v975 = vmul.f32 %v974, 2.0
  %v976 = vsub.f32 %v975, 1.0
  %v977 = vmul.f32 %v974, %v877
  %979 = vrot.lane.b32.xlu0 %v976, 32
  %v980 = vpop.permute.xlu0 %979
  %v982 = vmul.f32 %v974, %v980
  %984 = vrot.lane.b32.xlu0 %v982, 32
  %v985 = vpop.permute.xlu0 %984
  %v987 = vadd.f32 %v977, %v985
  %v988 = vtanh.pop %v987
  %990 = vrot.lane.b32.xlu0 %v988, 32
  %v991 = vpop.permute.xlu0 %990
  %v993 = vmul.f32 %v974, %v991
  %995 = vrot.lane.b32.xlu0 %v993, 64
  %v996 = vpop.permute.xlu0 %995
  %s998 = scalar_lea.vmem [#allocation3], 56
  %999 = vst.msk [vmem:[%s998] sm:$0xff] %vm125, %v996
  %v1000 = vld [vmem:[#allocation3] sm:$0xff]
  %v1001 = vld [vmem:[#allocation3 + $0x8] sm:$0xff]
  %v1002 = vld [vmem:[#allocation3 + $0x10] sm:$0xff]
  %v1003 = vld [vmem:[#allocation3 + $0x18] sm:$0xff]
  %v1004 = vld [vmem:[#allocation3 + $0x20] sm:$0xff]
  %v1005 = vld [vmem:[#allocation3 + $0x28] sm:$0xff]
  %v1006 = vld [vmem:[#allocation3 + $0x30] sm:$0xff]
  %v1007 = vld [vmem:[#allocation3 + $0x38] sm:$0xff]
  %v1008 = vld [vmem:[%s4] sm:$0xff]
  %v1009 = vld [vmem:[%s4 + $0x8] sm:$0xff]
  %v1010 = vld [vmem:[%s4 + $0x10] sm:$0xff]
  %v1011 = vld [vmem:[%s4 + $0x18] sm:$0xff]
  %v1012 = vld [vmem:[%s6] sm:$0x1]
  %v1014 = vlaneseq
  %v1015 = vshrl.u32 %v1014, 7
  %v1016 = vsub.s32 0, %v1015
  %v1017 = vrot.slane %v1012, %v1016
  %v1020 = vsel %vm125, %v1000, 0
  %v1023 = vsel %vm125, %v1001, 0
  %v1026 = vsel %vm125, %v1002, 0
  %v1029 = vsel %vm125, %v1003, 0
  %v1032 = vsel %vm125, %v1004, 0
  %v1035 = vsel %vm125, %v1005, 0
  %v1038 = vsel %vm125, %v1006, 0
  %v1041 = vsel %vm125, %v1007, 0
  %1043 = vmatprep.subr.mxu0 0.0
  %1044 = vmatpush1.msra.mxu0 0.0
  %1045 = vmatprep.subr.mxu0 0.0
  %1046 = vmatpush1.msra.mxu0 0.0
  %1047 = vmatprep.subr.mxu0 0.0
  %1048 = vmatpush1.msra.mxu0 0.0
  %1049 = vmatprep.subr.mxu0 0.0
  %1050 = vmatpush1.msra.mxu0 0.0
  %1051 = vmatprep.subr.mxu0 0.0
  %1052 = vmatpush1.msra.mxu0 0.0
  %1053 = vmatprep.subr.mxu0 0.0
  %1054 = vmatpush1.msra.mxu0 0.0
  %1055 = vmatprep.subr.mxu0 0.0
  %1056 = vmatpush1.msra.mxu0 0.0
  %1057 = vmatprep.subr.mxu0 0.0
  %1058 = vmatpush1.msra.mxu0 0.0
  %1059 = vmatprep.subr.mxu0 0.0
  %1060 = vmatpush1.msra.mxu0 0.0
  %1061 = vmatprep.subr.mxu0 0.0
  %1062 = vmatpush1.msra.mxu0 0.0
  %1063 = vmatprep.subr.mxu0 0.0
  %1064 = vmatpush1.msra.mxu0 0.0
  %1065 = vmatprep.subr.mxu0 0.0
  %1066 = vmatpush1.msra.mxu0 0.0
  %1067 = vmatprep.subr.mxu0 0.0
  %1068 = vmatpush1.msra.mxu0 %v1011
  %1069 = vmatprep.subr.mxu0 0.0
  %1070 = vmatpush1.msra.mxu0 %v1010
  %1071 = vmatprep.subr.mxu0 0.0
  %1072 = vmatpush1.msra.mxu0 %v1009
  %1073 = vmatprep.subr.mxu0 0.0
  %1074 = vmatpush1.msra.mxu0 %v1008
  %1075 = vmatprep.subr.mxu0 0.0
  %1076 = vmatpush2.msra.mxu0 0.0
  %1077 = vmatprep.subr.mxu0 0.0
  %1078 = vmatpush2.msra.mxu0 0.0
  %1079 = vmatprep.subr.mxu0 0.0
  %1080 = vmatpush2.msra.mxu0 0.0
  %1081 = vmatprep.subr.mxu0 0.0
  %1082 = vmatpush2.msra.mxu0 0.0
  %1083 = vmatprep.subr.mxu0 0.0
  %1084 = vmatpush2.msra.mxu0 0.0
  %1085 = vmatprep.subr.mxu0 0.0
  %1086 = vmatpush2.msra.mxu0 0.0
  %1087 = vmatprep.subr.mxu0 0.0
  %1088 = vmatpush2.msra.mxu0 0.0
  %1089 = vmatprep.subr.mxu0 0.0
  %1090 = vmatpush2.msra.mxu0 0.0
  %1091 = vmatprep.subr.mxu0 0.0
  %1092 = vmatpush2.msra.mxu0 0.0
  %1093 = vmatprep.subr.mxu0 0.0
  %1094 = vmatpush2.msra.mxu0 0.0
  %1095 = vmatprep.subr.mxu0 0.0
  %1096 = vmatpush2.msra.mxu0 0.0
  %1097 = vmatprep.subr.mxu0 0.0
  %1098 = vmatpush2.msra.mxu0 0.0
  %1099 = vmatprep.subr.mxu0 0.0
  %1100 = vmatpush2.msra.mxu0 0.0
  %1101 = vmatprep.subr.mxu0 0.0
  %1102 = vmatpush2.msra.mxu0 0.0
  %1103 = vmatprep.subr.mxu0 0.0
  %1104 = vmatpush2.msra.mxu0 0.0
  %1105 = vmatprep.subr.mxu0 0.0
  %1106 = vmatpush2.msra.mxu0 0.0
  %1107 = vmatprep.mubr.f32.mxu0 0.0
  %1108 = vmatmul.mubr.f32.gmra.mxu0 %v1020
  %v1109 = vpop.f32.mrf.mxu0
  %v1110 = vadd.f32 %v1017, %v1109
  %v1111 = vpop.f32.mrf.mxu0
  %1112 = vmatprep.mubr.f32.mxu0 0.0
  %1113 = vmatmul.mubr.f32.gmra.mxu0 %v1023
  %v1114 = vpop.f32.mrf.mxu0
  %v1115 = vadd.f32 %v1017, %v1114
  %v1116 = vpop.f32.mrf.mxu0
  %1117 = vmatprep.mubr.f32.mxu0 0.0
  %1118 = vmatmul.mubr.f32.gmra.mxu0 %v1026
  %v1119 = vpop.f32.mrf.mxu0
  %v1120 = vadd.f32 %v1017, %v1119
  %v1121 = vpop.f32.mrf.mxu0
  %1122 = vmatprep.mubr.f32.mxu0 0.0
  %1123 = vmatmul.mubr.f32.gmra.mxu0 %v1029
  %v1124 = vpop.f32.mrf.mxu0
  %v1125 = vadd.f32 %v1017, %v1124
  %v1126 = vpop.f32.mrf.mxu0
  %1127 = vmatprep.mubr.f32.mxu0 0.0
  %1128 = vmatmul.mubr.f32.gmra.mxu0 %v1032
  %v1129 = vpop.f32.mrf.mxu0
  %v1130 = vadd.f32 %v1017, %v1129
  %v1131 = vpop.f32.mrf.mxu0
  %1132 = vmatprep.mubr.f32.mxu0 0.0
  %1133 = vmatmul.mubr.f32.gmra.mxu0 %v1035
  %v1134 = vpop.f32.mrf.mxu0
  %v1135 = vadd.f32 %v1017, %v1134
  %v1136 = vpop.f32.mrf.mxu0
  %1137 = vmatprep.mubr.f32.mxu0 0.0
  %1138 = vmatmul.mubr.f32.gmra.mxu0 %v1038
  %v1139 = vpop.f32.mrf.mxu0
  %v1140 = vadd.f32 %v1017, %v1139
  %v1141 = vpop.f32.mrf.mxu0
  %1142 = vmatprep.mubr.f32.mxu0 0.0
  %1143 = vmatmul.mubr.f32.gmra.mxu0 %v1041
  %v1144 = vpop.f32.mrf.mxu0
  %v1145 = vadd.f32 %v1017, %v1144
  %v1146 = vpop.f32.mrf.mxu0
  %1147 = vdwg.mxu0
  %1148 = vst [vmem:[#allocation2] sm:$0xff] %v1110
  %1149 = vst [vmem:[#allocation2 + $0x8] sm:$0xff] %v1115
  %1150 = vst [vmem:[#allocation2 + $0x10] sm:$0xff] %v1120
  %1151 = vst [vmem:[#allocation2 + $0x18] sm:$0xff] %v1125
  %1152 = vst [vmem:[#allocation2 + $0x20] sm:$0xff] %v1130
  %1153 = vst [vmem:[#allocation2 + $0x28] sm:$0xff] %v1135
  %1154 = vst [vmem:[#allocation2 + $0x30] sm:$0xff] %v1140
  %1155 = vst [vmem:[#allocation2 + $0x38] sm:$0xff] %v1145
  %v1156 = vld [vmem:[#allocation2] sm:$0xff]
  %v1157 = vld [vmem:[%s5] sm:$0xff]
  %v1158 = vld [vmem:[%s5 + $0x8] sm:$0xff]
  %v1159 = vld [vmem:[%s5 + $0x10] sm:$0xff]
  %v1160 = vld [vmem:[%s5 + $0x18] sm:$0xff]
  %1161 = vmatprep.subr.mxu0 0.0
  %1162 = vmatpush1.msra.mxu0 0.0
  %1163 = vmatprep.subr.mxu0 0.0
  %1164 = vmatpush1.msra.mxu0 0.0
  %1165 = vmatprep.subr.mxu0 0.0
  %1166 = vmatpush1.msra.mxu0 0.0
  %1167 = vmatprep.subr.mxu0 0.0
  %1168 = vmatpush1.msra.mxu0 0.0
  %1169 = vmatprep.subr.mxu0 0.0
  %1170 = vmatpush1.msra.mxu0 0.0
  %1171 = vmatprep.subr.mxu0 0.0
  %1172 = vmatpush1.msra.mxu0 0.0
  %1173 = vmatprep.subr.mxu0 0.0
  %1174 = vmatpush1.msra.mxu0 0.0
  %1175 = vmatprep.subr.mxu0 0.0
  %1176 = vmatpush1.msra.mxu0 0.0
  %1177 = vmatprep.subr.mxu0 0.0
  %1178 = vmatpush1.msra.mxu0 0.0
  %1179 = vmatprep.subr.mxu0 0.0
  %1180 = vmatpush1.msra.mxu0 0.0
  %1181 = vmatprep.subr.mxu0 0.0
  %1182 = vmatpush1.msra.mxu0 0.0
  %1183 = vmatprep.subr.mxu0 0.0
  %1184 = vmatpush1.msra.mxu0 0.0
  %1185 = vmatprep.subr.mxu0 0.0
  %1186 = vmatpush1.msra.mxu0 %v1160
  %1187 = vmatprep.subr.mxu0 0.0
  %1188 = vmatpush1.msra.mxu0 %v1159
  %1189 = vmatprep.subr.mxu0 0.0
  %1190 = vmatpush1.msra.mxu0 %v1158
  %1191 = vmatprep.subr.mxu0 0.0
  %1192 = vmatpush1.msra.mxu0 %v1157
  %1193 = vmatprep.subr.mxu0 0.0
  %1194 = vmatpush2.msra.mxu0 0.0
  %1195 = vmatprep.subr.mxu0 0.0
  %1196 = vmatpush2.msra.mxu0 0.0
  %1197 = vmatprep.subr.mxu0 0.0
  %1198 = vmatpush2.msra.mxu0 0.0
  %1199 = vmatprep.subr.mxu0 0.0
  %1200 = vmatpush2.msra.mxu0 0.0
  %1201 = vmatprep.subr.mxu0 0.0
  %1202 = vmatpush2.msra.mxu0 0.0
  %1203 = vmatprep.subr.mxu0 0.0
  %1204 = vmatpush2.msra.mxu0 0.0
  %1205 = vmatprep.subr.mxu0 0.0
  %1206 = vmatpush2.msra.mxu0 0.0
  %1207 = vmatprep.subr.mxu0 0.0
  %1208 = vmatpush2.msra.mxu0 0.0
  %1209 = vmatprep.subr.mxu0 0.0
  %1210 = vmatpush2.msra.mxu0 0.0
  %1211 = vmatprep.subr.mxu0 0.0
  %1212 = vmatpush2.msra.mxu0 0.0
  %1213 = vmatprep.subr.mxu0 0.0
  %1214 = vmatpush2.msra.mxu0 0.0
  %1215 = vmatprep.subr.mxu0 0.0
  %1216 = vmatpush2.msra.mxu0 0.0
  %1217 = vmatprep.subr.mxu0 0.0
  %1218 = vmatpush2.msra.mxu0 0.0
  %1219 = vmatprep.subr.mxu0 0.0
  %1220 = vmatpush2.msra.mxu0 0.0
  %1221 = vmatprep.subr.mxu0 0.0
  %1222 = vmatpush2.msra.mxu0 0.0
  %1223 = vmatprep.subr.mxu0 0.0
  %1224 = vmatpush2.msra.mxu0 0.0
  %1225 = vmatprep.mubr.f32.mxu0 0.0
  %1226 = vmatmul.mubr.f32.gmra.mxu0 %v127
  %v1227 = vpop.f32.mrf.mxu0
  %v1228 = vadd.f32 0.0, %v1227
  %v1229 = vpop.f32.mrf.mxu0
  %1230 = vdwg.mxu0
  %v1231 = vadd.f32 %v1156, %v1228
  %v1232 = vxor.u32 %v1231, 2147483648
  %v1233 = vmul.f32 %v1232, 1.442695
  %v1234 = vpow.pop %v1233
  %v1235 = vadd.f32 %v1234, 1.0
  %v1236 = vrcp.pop %v1235
  %v1237 = vmul.f32 1.0, %v1236
  %v1238 = vmul.f32 %v1237, 2.0
  %v1239 = vsub.f32 %v1238, 1.0
  %v1240 = vmul.f32 %v1237, 0.0
  %1242 = vrot.lane.b32.xlu0 %v1239, 32
  %v1243 = vpop.permute.xlu0 %1242
  %v1245 = vmul.f32 %v1237, %v1243
  %1247 = vrot.lane.b32.xlu0 %v1245, 32
  %v1248 = vpop.permute.xlu0 %1247
  %v1250 = vadd.f32 %v1240, %v1248
  %v1251 = vtanh.pop %v1250
  %1253 = vrot.lane.b32.xlu0 %v1251, 32
  %v1254 = vpop.permute.xlu0 %1253
  %v1256 = vmul.f32 %v1237, %v1254
  %v1257 = vld [vmem:[%s230] sm:$0xff]
  %1259 = vrot.lane.b32.xlu0 %v1256, 64
  %v1260 = vpop.permute.xlu0 %1259
  %v1261 = vsel %vm125, %v1260, 0
  %1263 = vmatprep.subr.mxu0 0.0
  %1264 = vmatpush1.msra.mxu0 0.0
  %1265 = vmatprep.subr.mxu0 0.0
  %1266 = vmatpush1.msra.mxu0 0.0
  %1267 = vmatprep.subr.mxu0 0.0
  %1268 = vmatpush1.msra.mxu0 0.0
  %1269 = vmatprep.subr.mxu0 0.0
  %1270 = vmatpush1.msra.mxu0 0.0
  %1271 = vmatprep.subr.mxu0 0.0
  %1272 = vmatpush1.msra.mxu0 0.0
  %1273 = vmatprep.subr.mxu0 0.0
  %1274 = vmatpush1.msra.mxu0 0.0
  %1275 = vmatprep.subr.mxu0 0.0
  %1276 = vmatpush1.msra.mxu0 0.0
  %1277 = vmatprep.subr.mxu0 0.0
  %1278 = vmatpush1.msra.mxu0 0.0
  %1279 = vmatprep.subr.mxu0 0.0
  %1280 = vmatpush1.msra.mxu0 0.0
  %1281 = vmatprep.subr.mxu0 0.0
  %1282 = vmatpush1.msra.mxu0 0.0
  %1283 = vmatprep.subr.mxu0 0.0
  %1284 = vmatpush1.msra.mxu0 0.0
  %1285 = vmatprep.subr.mxu0 0.0
  %1286 = vmatpush1.msra.mxu0 0.0
  %1287 = vmatprep.subr.mxu0 0.0
  %1288 = vmatpush1.msra.mxu0 %v1160
  %1289 = vmatprep.subr.mxu0 0.0
  %1290 = vmatpush1.msra.mxu0 %v1159
  %1291 = vmatprep.subr.mxu0 0.0
  %1292 = vmatpush1.msra.mxu0 %v1158
  %1293 = vmatprep.subr.mxu0 0.0
  %1294 = vmatpush1.msra.mxu0 %v1157
  %1295 = vmatprep.subr.mxu0 0.0
  %1296 = vmatpush2.msra.mxu0 0.0
  %1297 = vmatprep.subr.mxu0 0.0
  %1298 = vmatpush2.msra.mxu0 0.0
  %1299 = vmatprep.subr.mxu0 0.0
  %1300 = vmatpush2.msra.mxu0 0.0
  %1301 = vmatprep.subr.mxu0 0.0
  %1302 = vmatpush2.msra.mxu0 0.0
  %1303 = vmatprep.subr.mxu0 0.0
  %1304 = vmatpush2.msra.mxu0 0.0
  %1305 = vmatprep.subr.mxu0 0.0
  %1306 = vmatpush2.msra.mxu0 0.0
  %1307 = vmatprep.subr.mxu0 0.0
  %1308 = vmatpush2.msra.mxu0 0.0
  %1309 = vmatprep.subr.mxu0 0.0
  %1310 = vmatpush2.msra.mxu0 0.0
  %1311 = vmatprep.subr.mxu0 0.0
  %1312 = vmatpush2.msra.mxu0 0.0
  %1313 = vmatprep.subr.mxu0 0.0
  %1314 = vmatpush2.msra.mxu0 0.0
  %1315 = vmatprep.subr.mxu0 0.0
  %1316 = vmatpush2.msra.mxu0 0.0
  %1317 = vmatprep.subr.mxu0 0.0
  %1318 = vmatpush2.msra.mxu0 0.0
  %1319 = vmatprep.subr.mxu0 0.0
  %1320 = vmatpush2.msra.mxu0 0.0
  %1321 = vmatprep.subr.mxu0 0.0
  %1322 = vmatpush2.msra.mxu0 0.0
  %1323 = vmatprep.subr.mxu0 0.0
  %1324 = vmatpush2.msra.mxu0 0.0
  %1325 = vmatprep.subr.mxu0 0.0
  %1326 = vmatpush2.msra.mxu0 0.0
  %1327 = vmatprep.mubr.f32.mxu0 0.0
  %1328 = vmatmul.mubr.f32.gmra.mxu0 %v1261
  %v1329 = vpop.f32.mrf.mxu0
  %v1330 = vadd.f32 0.0, %v1329
  %v1331 = vpop.f32.mrf.mxu0
  %1332 = vdwg.mxu0
  %v1333 = vadd.f32 %v1257, %v1330
  %v1334 = vxor.u32 %v1333, 2147483648
  %v1335 = vmul.f32 %v1334, 1.442695
  %v1336 = vpow.pop %v1335
  %v1337 = vadd.f32 %v1336, 1.0
  %v1338 = vrcp.pop %v1337
  %v1339 = vmul.f32 1.0, %v1338
  %v1340 = vmul.f32 %v1339, 2.0
  %v1341 = vsub.f32 %v1340, 1.0
  %v1342 = vmul.f32 %v1339, %v1250
  %1344 = vrot.lane.b32.xlu0 %v1341, 32
  %v1345 = vpop.permute.xlu0 %1344
  %v1347 = vmul.f32 %v1339, %v1345
  %1349 = vrot.lane.b32.xlu0 %v1347, 32
  %v1350 = vpop.permute.xlu0 %1349
  %v1352 = vadd.f32 %v1342, %v1350
  %v1353 = vtanh.pop %v1352
  %1355 = vrot.lane.b32.xlu0 %v1353, 32
  %v1356 = vpop.permute.xlu0 %1355
  %v1358 = vmul.f32 %v1339, %v1356
  %v1359 = vld [vmem:[%s340] sm:$0xff]
  %1361 = vrot.lane.b32.xlu0 %v1358, 64
  %v1362 = vpop.permute.xlu0 %1361
  %v1363 = vsel %vm125, %v1362, 0
  %1365 = vmatprep.subr.mxu0 0.0
  %1366 = vmatpush1.msra.mxu0 0.0
  %1367 = vmatprep.subr.mxu0 0.0
  %1368 = vmatpush1.msra.mxu0 0.0
  %1369 = vmatprep.subr.mxu0 0.0
  %1370 = vmatpush1.msra.mxu0 0.0
  %1371 = vmatprep.subr.mxu0 0.0
  %1372 = vmatpush1.msra.mxu0 0.0
  %1373 = vmatprep.subr.mxu0 0.0
  %1374 = vmatpush1.msra.mxu0 0.0
  %1375 = vmatprep.subr.mxu0 0.0
  %1376 = vmatpush1.msra.mxu0 0.0
  %1377 = vmatprep.subr.mxu0 0.0
  %1378 = vmatpush1.msra.mxu0 0.0
  %1379 = vmatprep.subr.mxu0 0.0
  %1380 = vmatpush1.msra.mxu0 0.0
  %1381 = vmatprep.subr.mxu0 0.0
  %1382 = vmatpush1.msra.mxu0 0.0
  %1383 = vmatprep.subr.mxu0 0.0
  %1384 = vmatpush1.msra.mxu0 0.0
  %1385 = vmatprep.subr.mxu0 0.0
  %1386 = vmatpush1.msra.mxu0 0.0
  %1387 = vmatprep.subr.mxu0 0.0
  %1388 = vmatpush1.msra.mxu0 0.0
  %1389 = vmatprep.subr.mxu0 0.0
  %1390 = vmatpush1.msra.mxu0 %v1160
  %1391 = vmatprep.subr.mxu0 0.0
  %1392 = vmatpush1.msra.mxu0 %v1159
  %1393 = vmatprep.subr.mxu0 0.0
  %1394 = vmatpush1.msra.mxu0 %v1158
  %1395 = vmatprep.subr.mxu0 0.0
  %1396 = vmatpush1.msra.mxu0 %v1157
  %1397 = vmatprep.subr.mxu0 0.0
  %1398 = vmatpush2.msra.mxu0 0.0
  %1399 = vmatprep.subr.mxu0 0.0
  %1400 = vmatpush2.msra.mxu0 0.0
  %1401 = vmatprep.subr.mxu0 0.0
  %1402 = vmatpush2.msra.mxu0 0.0
  %1403 = vmatprep.subr.mxu0 0.0
  %1404 = vmatpush2.msra.mxu0 0.0
  %1405 = vmatprep.subr.mxu0 0.0
  %1406 = vmatpush2.msra.mxu0 0.0
  %1407 = vmatprep.subr.mxu0 0.0
  %1408 = vmatpush2.msra.mxu0 0.0
  %1409 = vmatprep.subr.mxu0 0.0
  %1410 = vmatpush2.msra.mxu0 0.0
  %1411 = vmatprep.subr.mxu0 0.0
  %1412 = vmatpush2.msra.mxu0 0.0
  %1413 = vmatprep.subr.mxu0 0.0
  %1414 = vmatpush2.msra.mxu0 0.0
  %1415 = vmatprep.subr.mxu0 0.0
  %1416 = vmatpush2.msra.mxu0 0.0
  %1417 = vmatprep.subr.mxu0 0.0
  %1418 = vmatpush2.msra.mxu0 0.0
  %1419 = vmatprep.subr.mxu0 0.0
  %1420 = vmatpush2.msra.mxu0 0.0
  %1421 = vmatprep.subr.mxu0 0.0
  %1422 = vmatpush2.msra.mxu0 0.0
  %1423 = vmatprep.subr.mxu0 0.0
  %1424 = vmatpush2.msra.mxu0 0.0
  %1425 = vmatprep.subr.mxu0 0.0
  %1426 = vmatpush2.msra.mxu0 0.0
  %1427 = vmatprep.subr.mxu0 0.0
  %1428 = vmatpush2.msra.mxu0 0.0
  %1429 = vmatprep.mubr.f32.mxu0 0.0
  %1430 = vmatmul.mubr.f32.gmra.mxu0 %v1363
  %v1431 = vpop.f32.mrf.mxu0
  %v1432 = vadd.f32 0.0, %v1431
  %v1433 = vpop.f32.mrf.mxu0
  %1434 = vdwg.mxu0
  %v1435 = vadd.f32 %v1359, %v1432
  %v1436 = vxor.u32 %v1435, 2147483648
  %v1437 = vmul.f32 %v1436, 1.442695
  %v1438 = vpow.pop %v1437
  %v1439 = vadd.f32 %v1438, 1.0
  %v1440 = vrcp.pop %v1439
  %v1441 = vmul.f32 1.0, %v1440
  %v1442 = vmul.f32 %v1441, 2.0
  %v1443 = vsub.f32 %v1442, 1.0
  %v1444 = vmul.f32 %v1441, %v1352
  %1446 = vrot.lane.b32.xlu0 %v1443, 32
  %v1447 = vpop.permute.xlu0 %1446
  %v1449 = vmul.f32 %v1441, %v1447
  %1451 = vrot.lane.b32.xlu0 %v1449, 32
  %v1452 = vpop.permute.xlu0 %1451
  %v1454 = vadd.f32 %v1444, %v1452
  %v1455 = vtanh.pop %v1454
  %1457 = vrot.lane.b32.xlu0 %v1455, 32
  %v1458 = vpop.permute.xlu0 %1457
  %v1460 = vmul.f32 %v1441, %v1458
  %v1461 = vld [vmem:[%s450] sm:$0xff]
  %1463 = vrot.lane.b32.xlu0 %v1460, 64
  %v1464 = vpop.permute.xlu0 %1463
  %v1465 = vsel %vm125, %v1464, 0
  %1467 = vmatprep.subr.mxu0 0.0
  %1468 = vmatpush1.msra.mxu0 0.0
  %1469 = vmatprep.subr.mxu0 0.0
  %1470 = vmatpush1.msra.mxu0 0.0
  %1471 = vmatprep.subr.mxu0 0.0
  %1472 = vmatpush1.msra.mxu0 0.0
  %1473 = vmatprep.subr.mxu0 0.0
  %1474 = vmatpush1.msra.mxu0 0.0
  %1475 = vmatprep.subr.mxu0 0.0
  %1476 = vmatpush1.msra.mxu0 0.0
  %1477 = vmatprep.subr.mxu0 0.0
  %1478 = vmatpush1.msra.mxu0 0.0
  %1479 = vmatprep.subr.mxu0 0.0
  %1480 = vmatpush1.msra.mxu0 0.0
  %1481 = vmatprep.subr.mxu0 0.0
  %1482 = vmatpush1.msra.mxu0 0.0
  %1483 = vmatprep.subr.mxu0 0.0
  %1484 = vmatpush1.msra.mxu0 0.0
  %1485 = vmatprep.subr.mxu0 0.0
  %1486 = vmatpush1.msra.mxu0 0.0
  %1487 = vmatprep.subr.mxu0 0.0
  %1488 = vmatpush1.msra.mxu0 0.0
  %1489 = vmatprep.subr.mxu0 0.0
  %1490 = vmatpush1.msra.mxu0 0.0
  %1491 = vmatprep.subr.mxu0 0.0
  %1492 = vmatpush1.msra.mxu0 %v1160
  %1493 = vmatprep.subr.mxu0 0.0
  %1494 = vmatpush1.msra.mxu0 %v1159
  %1495 = vmatprep.subr.mxu0 0.0
  %1496 = vmatpush1.msra.mxu0 %v1158
  %1497 = vmatprep.subr.mxu0 0.0
  %1498 = vmatpush1.msra.mxu0 %v1157
  %1499 = vmatprep.subr.mxu0 0.0
  %1500 = vmatpush2.msra.mxu0 0.0
  %1501 = vmatprep.subr.mxu0 0.0
  %1502 = vmatpush2.msra.mxu0 0.0
  %1503 = vmatprep.subr.mxu0 0.0
  %1504 = vmatpush2.msra.mxu0 0.0
  %1505 = vmatprep.subr.mxu0 0.0
  %1506 = vmatpush2.msra.mxu0 0.0
  %1507 = vmatprep.subr.mxu0 0.0
  %1508 = vmatpush2.msra.mxu0 0.0
  %1509 = vmatprep.subr.mxu0 0.0
  %1510 = vmatpush2.msra.mxu0 0.0
  %1511 = vmatprep.subr.mxu0 0.0
  %1512 = vmatpush2.msra.mxu0 0.0
  %1513 = vmatprep.subr.mxu0 0.0
  %1514 = vmatpush2.msra.mxu0 0.0
  %1515 = vmatprep.subr.mxu0 0.0
  %1516 = vmatpush2.msra.mxu0 0.0
  %1517 = vmatprep.subr.mxu0 0.0
  %1518 = vmatpush2.msra.mxu0 0.0
  %1519 = vmatprep.subr.mxu0 0.0
  %1520 = vmatpush2.msra.mxu0 0.0
  %1521 = vmatprep.subr.mxu0 0.0
  %1522 = vmatpush2.msra.mxu0 0.0
  %1523 = vmatprep.subr.mxu0 0.0
  %1524 = vmatpush2.msra.mxu0 0.0
  %1525 = vmatprep.subr.mxu0 0.0
  %1526 = vmatpush2.msra.mxu0 0.0
  %1527 = vmatprep.subr.mxu0 0.0
  %1528 = vmatpush2.msra.mxu0 0.0
  %1529 = vmatprep.subr.mxu0 0.0
  %1530 = vmatpush2.msra.mxu0 0.0
  %1531 = vmatprep.mubr.f32.mxu0 0.0
  %1532 = vmatmul.mubr.f32.gmra.mxu0 %v1465
  %v1533 = vpop.f32.mrf.mxu0
  %v1534 = vadd.f32 0.0, %v1533
  %v1535 = vpop.f32.mrf.mxu0
  %1536 = vdwg.mxu0
  %v1537 = vadd.f32 %v1461, %v1534
  %v1538 = vxor.u32 %v1537, 2147483648
  %v1539 = vmul.f32 %v1538, 1.442695
  %v1540 = vpow.pop %v1539
  %v1541 = vadd.f32 %v1540, 1.0
  %v1542 = vrcp.pop %v1541
  %v1543 = vmul.f32 1.0, %v1542
  %v1544 = vmul.f32 %v1543, 2.0
  %v1545 = vsub.f32 %v1544, 1.0
  %v1546 = vmul.f32 %v1543, %v1454
  %1548 = vrot.lane.b32.xlu0 %v1545, 32
  %v1549 = vpop.permute.xlu0 %1548
  %v1551 = vmul.f32 %v1543, %v1549
  %1553 = vrot.lane.b32.xlu0 %v1551, 32
  %v1554 = vpop.permute.xlu0 %1553
  %v1556 = vadd.f32 %v1546, %v1554
  %v1557 = vtanh.pop %v1556
  %1559 = vrot.lane.b32.xlu0 %v1557, 32
  %v1560 = vpop.permute.xlu0 %1559
  %v1562 = vmul.f32 %v1543, %v1560
  %v1563 = vld [vmem:[%s560] sm:$0xff]
  %1565 = vrot.lane.b32.xlu0 %v1562, 64
  %v1566 = vpop.permute.xlu0 %1565
  %v1567 = vsel %vm125, %v1566, 0
  %1569 = vmatprep.subr.mxu0 0.0
  %1570 = vmatpush1.msra.mxu0 0.0
  %1571 = vmatprep.subr.mxu0 0.0
  %1572 = vmatpush1.msra.mxu0 0.0
  %1573 = vmatprep.subr.mxu0 0.0
  %1574 = vmatpush1.msra.mxu0 0.0
  %1575 = vmatprep.subr.mxu0 0.0
  %1576 = vmatpush1.msra.mxu0 0.0
  %1577 = vmatprep.subr.mxu0 0.0
  %1578 = vmatpush1.msra.mxu0 0.0
  %1579 = vmatprep.subr.mxu0 0.0
  %1580 = vmatpush1.msra.mxu0 0.0
  %1581 = vmatprep.subr.mxu0 0.0
  %1582 = vmatpush1.msra.mxu0 0.0
  %1583 = vmatprep.subr.mxu0 0.0
  %1584 = vmatpush1.msra.mxu0 0.0
  %1585 = vmatprep.subr.mxu0 0.0
  %1586 = vmatpush1.msra.mxu0 0.0
  %1587 = vmatprep.subr.mxu0 0.0
  %1588 = vmatpush1.msra.mxu0 0.0
  %1589 = vmatprep.subr.mxu0 0.0
  %1590 = vmatpush1.msra.mxu0 0.0
  %1591 = vmatprep.subr.mxu0 0.0
  %1592 = vmatpush1.msra.mxu0 0.0
  %1593 = vmatprep.subr.mxu0 0.0
  %1594 = vmatpush1.msra.mxu0 %v1160
  %1595 = vmatprep.subr.mxu0 0.0
  %1596 = vmatpush1.msra.mxu0 %v1159
  %1597 = vmatprep.subr.mxu0 0.0
  %1598 = vmatpush1.msra.mxu0 %v1158
  %1599 = vmatprep.subr.mxu0 0.0
  %1600 = vmatpush1.msra.mxu0 %v1157
  %1601 = vmatprep.subr.mxu0 0.0
  %1602 = vmatpush2.msra.mxu0 0.0
  %1603 = vmatprep.subr.mxu0 0.0
  %1604 = vmatpush2.msra.mxu0 0.0
  %1605 = vmatprep.subr.mxu0 0.0
  %1606 = vmatpush2.msra.mxu0 0.0
  %1607 = vmatprep.subr.mxu0 0.0
  %1608 = vmatpush2.msra.mxu0 0.0
  %1609 = vmatprep.subr.mxu0 0.0
  %1610 = vmatpush2.msra.mxu0 0.0
  %1611 = vmatprep.subr.mxu0 0.0
  %1612 = vmatpush2.msra.mxu0 0.0
  %1613 = vmatprep.subr.mxu0 0.0
  %1614 = vmatpush2.msra.mxu0 0.0
  %1615 = vmatprep.subr.mxu0 0.0
  %1616 = vmatpush2.msra.mxu0 0.0
  %1617 = vmatprep.subr.mxu0 0.0
  %1618 = vmatpush2.msra.mxu0 0.0
  %1619 = vmatprep.subr.mxu0 0.0
  %1620 = vmatpush2.msra.mxu0 0.0
  %1621 = vmatprep.subr.mxu0 0.0
  %1622 = vmatpush2.msra.mxu0 0.0
  %1623 = vmatprep.subr.mxu0 0.0
  %1624 = vmatpush2.msra.mxu0 0.0
  %1625 = vmatprep.subr.mxu0 0.0
  %1626 = vmatpush2.msra.mxu0 0.0
  %1627 = vmatprep.subr.mxu0 0.0
  %1628 = vmatpush2.msra.mxu0 0.0
  %1629 = vmatprep.subr.mxu0 0.0
  %1630 = vmatpush2.msra.mxu0 0.0
  %1631 = vmatprep.subr.mxu0 0.0
  %1632 = vmatpush2.msra.mxu0 0.0
  %1633 = vmatprep.mubr.f32.mxu0 0.0
  %1634 = vmatmul.mubr.f32.gmra.mxu0 %v1567
  %v1635 = vpop.f32.mrf.mxu0
  %v1636 = vadd.f32 0.0, %v1635
  %v1637 = vpop.f32.mrf.mxu0
  %1638 = vdwg.mxu0
  %v1639 = vadd.f32 %v1563, %v1636
  %v1640 = vxor.u32 %v1639, 2147483648
  %v1641 = vmul.f32 %v1640, 1.442695
  %v1642 = vpow.pop %v1641
  %v1643 = vadd.f32 %v1642, 1.0
  %v1644 = vrcp.pop %v1643
  %v1645 = vmul.f32 1.0, %v1644
  %v1646 = vmul.f32 %v1645, 2.0
  %v1647 = vsub.f32 %v1646, 1.0
  %v1648 = vmul.f32 %v1645, %v1556
  %1650 = vrot.lane.b32.xlu0 %v1647, 32
  %v1651 = vpop.permute.xlu0 %1650
  %v1653 = vmul.f32 %v1645, %v1651
  %1655 = vrot.lane.b32.xlu0 %v1653, 32
  %v1656 = vpop.permute.xlu0 %1655
  %v1658 = vadd.f32 %v1648, %v1656
  %v1659 = vtanh.pop %v1658
  %1661 = vrot.lane.b32.xlu0 %v1659, 32
  %v1662 = vpop.permute.xlu0 %1661
  %v1664 = vmul.f32 %v1645, %v1662
  %v1665 = vld [vmem:[%s670] sm:$0xff]
  %1667 = vrot.lane.b32.xlu0 %v1664, 64
  %v1668 = vpop.permute.xlu0 %1667
  %v1669 = vsel %vm125, %v1668, 0
  %1671 = vmatprep.subr.mxu0 0.0
  %1672 = vmatpush1.msra.mxu0 0.0
  %1673 = vmatprep.subr.mxu0 0.0
  %1674 = vmatpush1.msra.mxu0 0.0
  %1675 = vmatprep.subr.mxu0 0.0
  %1676 = vmatpush1.msra.mxu0 0.0
  %1677 = vmatprep.subr.mxu0 0.0
  %1678 = vmatpush1.msra.mxu0 0.0
  %1679 = vmatprep.subr.mxu0 0.0
  %1680 = vmatpush1.msra.mxu0 0.0
  %1681 = vmatprep.subr.mxu0 0.0
  %1682 = vmatpush1.msra.mxu0 0.0
  %1683 = vmatprep.subr.mxu0 0.0
  %1684 = vmatpush1.msra.mxu0 0.0
  %1685 = vmatprep.subr.mxu0 0.0
  %1686 = vmatpush1.msra.mxu0 0.0
  %1687 = vmatprep.subr.mxu0 0.0
  %1688 = vmatpush1.msra.mxu0 0.0
  %1689 = vmatprep.subr.mxu0 0.0
  %1690 = vmatpush1.msra.mxu0 0.0
  %1691 = vmatprep.subr.mxu0 0.0
  %1692 = vmatpush1.msra.mxu0 0.0
  %1693 = vmatprep.subr.mxu0 0.0
  %1694 = vmatpush1.msra.mxu0 0.0
  %1695 = vmatprep.subr.mxu0 0.0
  %1696 = vmatpush1.msra.mxu0 %v1160
  %1697 = vmatprep.subr.mxu0 0.0
  %1698 = vmatpush1.msra.mxu0 %v1159
  %1699 = vmatprep.subr.mxu0 0.0
  %1700 = vmatpush1.msra.mxu0 %v1158
  %1701 = vmatprep.subr.mxu0 0.0
  %1702 = vmatpush1.msra.mxu0 %v1157
  %1703 = vmatprep.subr.mxu0 0.0
  %1704 = vmatpush2.msra.mxu0 0.0
  %1705 = vmatprep.subr.mxu0 0.0
  %1706 = vmatpush2.msra.mxu0 0.0
  %1707 = vmatprep.subr.mxu0 0.0
  %1708 = vmatpush2.msra.mxu0 0.0
  %1709 = vmatprep.subr.mxu0 0.0
  %1710 = vmatpush2.msra.mxu0 0.0
  %1711 = vmatprep.subr.mxu0 0.0
  %1712 = vmatpush2.msra.mxu0 0.0
  %1713 = vmatprep.subr.mxu0 0.0
  %1714 = vmatpush2.msra.mxu0 0.0
  %1715 = vmatprep.subr.mxu0 0.0
  %1716 = vmatpush2.msra.mxu0 0.0
  %1717 = vmatprep.subr.mxu0 0.0
  %1718 = vmatpush2.msra.mxu0 0.0
  %1719 = vmatprep.subr.mxu0 0.0
  %1720 = vmatpush2.msra.mxu0 0.0
  %1721 = vmatprep.subr.mxu0 0.0
  %1722 = vmatpush2.msra.mxu0 0.0
  %1723 = vmatprep.subr.mxu0 0.0
  %1724 = vmatpush2.msra.mxu0 0.0
  %1725 = vmatprep.subr.mxu0 0.0
  %1726 = vmatpush2.msra.mxu0 0.0
  %1727 = vmatprep.subr.mxu0 0.0
  %1728 = vmatpush2.msra.mxu0 0.0
  %1729 = vmatprep.subr.mxu0 0.0
  %1730 = vmatpush2.msra.mxu0 0.0
  %1731 = vmatprep.subr.mxu0 0.0
  %1732 = vmatpush2.msra.mxu0 0.0
  %1733 = vmatprep.subr.mxu0 0.0
  %1734 = vmatpush2.msra.mxu0 0.0
  %1735 = vmatprep.mubr.f32.mxu0 0.0
  %1736 = vmatmul.mubr.f32.gmra.mxu0 %v1669
  %v1737 = vpop.f32.mrf.mxu0
  %v1738 = vadd.f32 0.0, %v1737
  %v1739 = vpop.f32.mrf.mxu0
  %1740 = vdwg.mxu0
  %v1741 = vadd.f32 %v1665, %v1738
  %v1742 = vxor.u32 %v1741, 2147483648
  %v1743 = vmul.f32 %v1742, 1.442695
  %v1744 = vpow.pop %v1743
  %v1745 = vadd.f32 %v1744, 1.0
  %v1746 = vrcp.pop %v1745
  %v1747 = vmul.f32 1.0, %v1746
  %v1748 = vmul.f32 %v1747, 2.0
  %v1749 = vsub.f32 %v1748, 1.0
  %v1750 = vmul.f32 %v1747, %v1658
  %1752 = vrot.lane.b32.xlu0 %v1749, 32
  %v1753 = vpop.permute.xlu0 %1752
  %v1755 = vmul.f32 %v1747, %v1753
  %1757 = vrot.lane.b32.xlu0 %v1755, 32
  %v1758 = vpop.permute.xlu0 %1757
  %v1760 = vadd.f32 %v1750, %v1758
  %v1761 = vtanh.pop %v1760
  %1763 = vrot.lane.b32.xlu0 %v1761, 32
  %v1764 = vpop.permute.xlu0 %1763
  %v1766 = vmul.f32 %v1747, %v1764
  %v1767 = vld [vmem:[%s780] sm:$0xff]
  %1769 = vrot.lane.b32.xlu0 %v1766, 64
  %v1770 = vpop.permute.xlu0 %1769
  %v1771 = vsel %vm125, %v1770, 0
  %1773 = vmatprep.subr.mxu0 0.0
  %1774 = vmatpush1.msra.mxu0 0.0
  %1775 = vmatprep.subr.mxu0 0.0
  %1776 = vmatpush1.msra.mxu0 0.0
  %1777 = vmatprep.subr.mxu0 0.0
  %1778 = vmatpush1.msra.mxu0 0.0
  %1779 = vmatprep.subr.mxu0 0.0
  %1780 = vmatpush1.msra.mxu0 0.0
  %1781 = vmatprep.subr.mxu0 0.0
  %1782 = vmatpush1.msra.mxu0 0.0
  %1783 = vmatprep.subr.mxu0 0.0
  %1784 = vmatpush1.msra.mxu0 0.0
  %1785 = vmatprep.subr.mxu0 0.0
  %1786 = vmatpush1.msra.mxu0 0.0
  %1787 = vmatprep.subr.mxu0 0.0
  %1788 = vmatpush1.msra.mxu0 0.0
  %1789 = vmatprep.subr.mxu0 0.0
  %1790 = vmatpush1.msra.mxu0 0.0
  %1791 = vmatprep.subr.mxu0 0.0
  %1792 = vmatpush1.msra.mxu0 0.0
  %1793 = vmatprep.subr.mxu0 0.0
  %1794 = vmatpush1.msra.mxu0 0.0
  %1795 = vmatprep.subr.mxu0 0.0
  %1796 = vmatpush1.msra.mxu0 0.0
  %1797 = vmatprep.subr.mxu0 0.0
  %1798 = vmatpush1.msra.mxu0 %v1160
  %1799 = vmatprep.subr.mxu0 0.0
  %1800 = vmatpush1.msra.mxu0 %v1159
  %1801 = vmatprep.subr.mxu0 0.0
  %1802 = vmatpush1.msra.mxu0 %v1158
  %1803 = vmatprep.subr.mxu0 0.0
  %1804 = vmatpush1.msra.mxu0 %v1157
  %1805 = vmatprep.subr.mxu0 0.0
  %1806 = vmatpush2.msra.mxu0 0.0
  %1807 = vmatprep.subr.mxu0 0.0
  %1808 = vmatpush2.msra.mxu0 0.0
  %1809 = vmatprep.subr.mxu0 0.0
  %1810 = vmatpush2.msra.mxu0 0.0
  %1811 = vmatprep.subr.mxu0 0.0
  %1812 = vmatpush2.msra.mxu0 0.0
  %1813 = vmatprep.subr.mxu0 0.0
  %1814 = vmatpush2.msra.mxu0 0.0
  %1815 = vmatprep.subr.mxu0 0.0
  %1816 = vmatpush2.msra.mxu0 0.0
  %1817 = vmatprep.subr.mxu0 0.0
  %1818 = vmatpush2.msra.mxu0 0.0
  %1819 = vmatprep.subr.mxu0 0.0
  %1820 = vmatpush2.msra.mxu0 0.0
  %1821 = vmatprep.subr.mxu0 0.0
  %1822 = vmatpush2.msra.mxu0 0.0
  %1823 = vmatprep.subr.mxu0 0.0
  %1824 = vmatpush2.msra.mxu0 0.0
  %1825 = vmatprep.subr.mxu0 0.0
  %1826 = vmatpush2.msra.mxu0 0.0
  %1827 = vmatprep.subr.mxu0 0.0
  %1828 = vmatpush2.msra.mxu0 0.0
  %1829 = vmatprep.subr.mxu0 0.0
  %1830 = vmatpush2.msra.mxu0 0.0
  %1831 = vmatprep.subr.mxu0 0.0
  %1832 = vmatpush2.msra.mxu0 0.0
  %1833 = vmatprep.subr.mxu0 0.0
  %1834 = vmatpush2.msra.mxu0 0.0
  %1835 = vmatprep.subr.mxu0 0.0
  %1836 = vmatpush2.msra.mxu0 0.0
  %1837 = vmatprep.mubr.f32.mxu0 0.0
  %1838 = vmatmul.mubr.f32.gmra.mxu0 %v1771
  %v1839 = vpop.f32.mrf.mxu0
  %v1840 = vadd.f32 0.0, %v1839
  %v1841 = vpop.f32.mrf.mxu0
  %1842 = vdwg.mxu0
  %v1843 = vadd.f32 %v1767, %v1840
  %v1844 = vxor.u32 %v1843, 2147483648
  %v1845 = vmul.f32 %v1844, 1.442695
  %v1846 = vpow.pop %v1845
  %v1847 = vadd.f32 %v1846, 1.0
  %v1848 = vrcp.pop %v1847
  %v1849 = vmul.f32 1.0, %v1848
  %v1850 = vmul.f32 %v1849, 2.0
  %v1851 = vsub.f32 %v1850, 1.0
  %v1852 = vmul.f32 %v1849, %v1760
  %1854 = vrot.lane.b32.xlu0 %v1851, 32
  %v1855 = vpop.permute.xlu0 %1854
  %v1857 = vmul.f32 %v1849, %v1855
  %1859 = vrot.lane.b32.xlu0 %v1857, 32
  %v1860 = vpop.permute.xlu0 %1859
  %v1862 = vadd.f32 %v1852, %v1860
  %v1863 = vtanh.pop %v1862
  %1865 = vrot.lane.b32.xlu0 %v1863, 32
  %v1866 = vpop.permute.xlu0 %1865
  %v1868 = vmul.f32 %v1849, %v1866
  %v1869 = vld [vmem:[%s890] sm:$0xff]
  %1871 = vrot.lane.b32.xlu0 %v1868, 64
  %v1872 = vpop.permute.xlu0 %1871
  %v1873 = vsel %vm125, %v1872, 0
  %1875 = vmatprep.subr.mxu0 0.0
  %1876 = vmatpush1.msra.mxu0 0.0
  %1877 = vmatprep.subr.mxu0 0.0
  %1878 = vmatpush1.msra.mxu0 0.0
  %1879 = vmatprep.subr.mxu0 0.0
  %1880 = vmatpush1.msra.mxu0 0.0
  %1881 = vmatprep.subr.mxu0 0.0
  %1882 = vmatpush1.msra.mxu0 0.0
  %1883 = vmatprep.subr.mxu0 0.0
  %1884 = vmatpush1.msra.mxu0 0.0
  %1885 = vmatprep.subr.mxu0 0.0
  %1886 = vmatpush1.msra.mxu0 0.0
  %1887 = vmatprep.subr.mxu0 0.0
  %1888 = vmatpush1.msra.mxu0 0.0
  %1889 = vmatprep.subr.mxu0 0.0
  %1890 = vmatpush1.msra.mxu0 0.0
  %1891 = vmatprep.subr.mxu0 0.0
  %1892 = vmatpush1.msra.mxu0 0.0
  %1893 = vmatprep.subr.mxu0 0.0
  %1894 = vmatpush1.msra.mxu0 0.0
  %1895 = vmatprep.subr.mxu0 0.0
  %1896 = vmatpush1.msra.mxu0 0.0
  %1897 = vmatprep.subr.mxu0 0.0
  %1898 = vmatpush1.msra.mxu0 0.0
  %1899 = vmatprep.subr.mxu0 0.0
  %1900 = vmatpush1.msra.mxu0 %v1160
  %1901 = vmatprep.subr.mxu0 0.0
  %1902 = vmatpush1.msra.mxu0 %v1159
  %1903 = vmatprep.subr.mxu0 0.0
  %1904 = vmatpush1.msra.mxu0 %v1158
  %1905 = vmatprep.subr.mxu0 0.0
  %1906 = vmatpush1.msra.mxu0 %v1157
  %1907 = vmatprep.subr.mxu0 0.0
  %1908 = vmatpush2.msra.mxu0 0.0
  %1909 = vmatprep.subr.mxu0 0.0
  %1910 = vmatpush2.msra.mxu0 0.0
  %1911 = vmatprep.subr.mxu0 0.0
  %1912 = vmatpush2.msra.mxu0 0.0
  %1913 = vmatprep.subr.mxu0 0.0
  %1914 = vmatpush2.msra.mxu0 0.0
  %1915 = vmatprep.subr.mxu0 0.0
  %1916 = vmatpush2.msra.mxu0 0.0
  %1917 = vmatprep.subr.mxu0 0.0
  %1918 = vmatpush2.msra.mxu0 0.0
  %1919 = vmatprep.subr.mxu0 0.0
  %1920 = vmatpush2.msra.mxu0 0.0
  %1921 = vmatprep.subr.mxu0 0.0
  %1922 = vmatpush2.msra.mxu0 0.0
  %1923 = vmatprep.subr.mxu0 0.0
  %1924 = vmatpush2.msra.mxu0 0.0
  %1925 = vmatprep.subr.mxu0 0.0
  %1926 = vmatpush2.msra.mxu0 0.0
  %1927 = vmatprep.subr.mxu0 0.0
  %1928 = vmatpush2.msra.mxu0 0.0
  %1929 = vmatprep.subr.mxu0 0.0
  %1930 = vmatpush2.msra.mxu0 0.0
  %1931 = vmatprep.subr.mxu0 0.0
  %1932 = vmatpush2.msra.mxu0 0.0
  %1933 = vmatprep.subr.mxu0 0.0
  %1934 = vmatpush2.msra.mxu0 0.0
  %1935 = vmatprep.subr.mxu0 0.0
  %1936 = vmatpush2.msra.mxu0 0.0
  %1937 = vmatprep.subr.mxu0 0.0
  %1938 = vmatpush2.msra.mxu0 0.0
  %1939 = vmatprep.mubr.f32.mxu0 0.0
  %1940 = vmatmul.mubr.f32.gmra.mxu0 %v1873
  %v1941 = vpop.f32.mrf.mxu0
  %v1942 = vadd.f32 0.0, %v1941
  %v1943 = vpop.f32.mrf.mxu0
  %1944 = vdwg.mxu0
  %v1945 = vadd.f32 %v1869, %v1942
  %v1946 = vxor.u32 %v1945, 2147483648
  %v1947 = vmul.f32 %v1946, 1.442695
  %v1948 = vpow.pop %v1947
  %v1949 = vadd.f32 %v1948, 1.0
  %v1950 = vrcp.pop %v1949
  %v1951 = vmul.f32 1.0, %v1950
  %v1952 = vmul.f32 %v1951, 2.0
  %v1953 = vsub.f32 %v1952, 1.0
  %v1954 = vmul.f32 %v1951, %v1862
  %1956 = vrot.lane.b32.xlu0 %v1953, 32
  %v1957 = vpop.permute.xlu0 %1956
  %v1959 = vmul.f32 %v1951, %v1957
  %1961 = vrot.lane.b32.xlu0 %v1959, 32
  %v1962 = vpop.permute.xlu0 %1961
  %v1964 = vadd.f32 %v1954, %v1962
  %v1965 = vtanh.pop %v1964
  %1967 = vrot.lane.b32.xlu0 %v1965, 32
  %v1968 = vpop.permute.xlu0 %1967
  %v1970 = vmul.f32 %v1951, %v1968
  %v1971 = vld [vmem:[%s7] sm:$0xff]
  %v1972 = vld [vmem:[%s7 + $0x8] sm:$0xff]
  %v1973 = vld [vmem:[%s7 + $0x10] sm:$0xff]
  %v1974 = vld [vmem:[%s7 + $0x18] sm:$0xff]
  %v1975 = vld [vmem:[#allocation4] sm:$0x1]
  %v1977 = vlaneseq
  %v1978 = vshrl.u32 %v1977, 7
  %v1979 = vsub.s32 0, %v1978
  %v1980 = vrot.slane %v1975, %v1979
  %1983 = vrot.lane.b32.xlu0 %v1970, 64
  %v1984 = vpop.permute.xlu0 %1983
  %v1985 = vsel %vm125, %v1984, 0
  %1987 = vmatprep.subr.mxu0 0.0
  %1988 = vmatpush1.msra.mxu0 0.0
  %1989 = vmatprep.subr.mxu0 0.0
  %1990 = vmatpush1.msra.mxu0 0.0
  %1991 = vmatprep.subr.mxu0 0.0
  %1992 = vmatpush1.msra.mxu0 0.0
  %1993 = vmatprep.subr.mxu0 0.0
  %1994 = vmatpush1.msra.mxu0 0.0
  %1995 = vmatprep.subr.mxu0 0.0
  %1996 = vmatpush1.msra.mxu0 0.0
  %1997 = vmatprep.subr.mxu0 0.0
  %1998 = vmatpush1.msra.mxu0 0.0
  %1999 = vmatprep.subr.mxu0 0.0
  %2000 = vmatpush1.msra.mxu0 0.0
  %2001 = vmatprep.subr.mxu0 0.0
  %2002 = vmatpush1.msra.mxu0 0.0
  %2003 = vmatprep.subr.mxu0 0.0
  %2004 = vmatpush1.msra.mxu0 0.0
  %2005 = vmatprep.subr.mxu0 0.0
  %2006 = vmatpush1.msra.mxu0 0.0
  %2007 = vmatprep.subr.mxu0 0.0
  %2008 = vmatpush1.msra.mxu0 0.0
  %2009 = vmatprep.subr.mxu0 0.0
  %2010 = vmatpush1.msra.mxu0 0.0
  %2011 = vmatprep.subr.mxu0 0.0
  %2012 = vmatpush1.msra.mxu0 %v1974
  %2013 = vmatprep.subr.mxu0 0.0
  %2014 = vmatpush1.msra.mxu0 %v1973
  %2015 = vmatprep.subr.mxu0 0.0
  %2016 = vmatpush1.msra.mxu0 %v1972
  %2017 = vmatprep.subr.mxu0 0.0
  %2018 = vmatpush1.msra.mxu0 %v1971
  %2019 = vmatprep.subr.mxu0 0.0
  %2020 = vmatpush2.msra.mxu0 0.0
  %2021 = vmatprep.subr.mxu0 0.0
  %2022 = vmatpush2.msra.mxu0 0.0
  %2023 = vmatprep.subr.mxu0 0.0
  %2024 = vmatpush2.msra.mxu0 0.0
  %2025 = vmatprep.subr.mxu0 0.0
  %2026 = vmatpush2.msra.mxu0 0.0
  %2027 = vmatprep.subr.mxu0 0.0
  %2028 = vmatpush2.msra.mxu0 0.0
  %2029 = vmatprep.subr.mxu0 0.0
  %2030 = vmatpush2.msra.mxu0 0.0
  %2031 = vmatprep.subr.mxu0 0.0
  %2032 = vmatpush2.msra.mxu0 0.0
  %2033 = vmatprep.subr.mxu0 0.0
  %2034 = vmatpush2.msra.mxu0 0.0
  %2035 = vmatprep.subr.mxu0 0.0
  %2036 = vmatpush2.msra.mxu0 0.0
  %2037 = vmatprep.subr.mxu0 0.0
  %2038 = vmatpush2.msra.mxu0 0.0
  %2039 = vmatprep.subr.mxu0 0.0
  %2040 = vmatpush2.msra.mxu0 0.0
  %2041 = vmatprep.subr.mxu0 0.0
  %2042 = vmatpush2.msra.mxu0 0.0
  %2043 = vmatprep.subr.mxu0 0.0
  %2044 = vmatpush2.msra.mxu0 0.0
  %2045 = vmatprep.subr.mxu0 0.0
  %2046 = vmatpush2.msra.mxu0 0.0
  %2047 = vmatprep.subr.mxu0 0.0
  %2048 = vmatpush2.msra.mxu0 0.0
  %2049 = vmatprep.subr.mxu0 0.0
  %2050 = vmatpush2.msra.mxu0 0.0
  %2051 = vmatprep.mubr.f32.mxu0 0.0
  %2052 = vmatmul.mubr.f32.gmra.mxu0 %v1985
  %v2053 = vpop.f32.mrf.mxu0
  %v2054 = vadd.f32 %v1980, %v2053
  %v2055 = vpop.f32.mrf.mxu0
  %2056 = vdwg.mxu0
  %vm2057 = vcmask 7168
  %2058 = vst.msk [vmem:[%s9] sm:$0xff] %vm2057, %v2054
  // Predicated region
  $region38: #{lstm_forward.1} parent=0 // pred_check
    _
  $region39: #{lstm_forward.1} parent=0 // pred_check_branch
    %2060 = sbr.rel (0) target = $region41
  $region40: #{lstm_forward.1} parent=0 // pred_region
    _
  $region41: #{lstm_forward.1} parent=0 // pred_fallthru
    _
  // Predicated region
  $region42: #{lstm_forward.1} parent=0 // pred_check
    _
  $region43: #{lstm_forward.1} parent=0 // pred_check_branch
    %2062 = sbr.rel (0) target = $region45
  $region44: #{lstm_forward.1} parent=0 // pred_region
    _
  $region45: #{lstm_forward.1} parent=0 // pred_fallthru
    _

</llo_original>
